<compile_context>
chip_gen: v7x
topology: tpu7x:2x2x1
jax: 0.10.0
libtpu: 0.0.40
codegen_flags: <defaults>
</compile_context>

<pallas_src>
import math
from functools import partial

import jax
import jax.numpy as jnp
from jax.experimental import pallas as pl
from jax.experimental.pallas import tpu as pltpu


def mha_kernel(q_ref, k_ref, v_ref,
               wq_ref, bq_ref, wk_ref, bk_ref, wv_ref, bv_ref, wo_ref, bo_ref,
               out_ref, ctx_ref, *, h, d_k):
    """One batch-chunk per grid step.

    q/k/v refs : (Bt, S, D) bf16   (cast in the wrapper -> half the HBM DMA)
    w*_refs    : (D, D)  bf16      (wq already folded with 1/sqrt(d_k))
    b*_refs    : (1, D)  f32       (bq already folded with 1/sqrt(d_k))
    out_ref    : (Bt, S, D) f32
    ctx_ref    : (Bt*S, D) bf16 VMEM scratch holding the head-concat context
    """
    Bt, S, D = q_ref.shape
    rows = Bt * S

    # Flatten batch*seq so each projection is a single full-depth (K=D) MXU GEMM.
    xq = q_ref[...].reshape(rows, D)
    xk = k_ref[...].reshape(rows, D)
    xv = v_ref[...].reshape(rows, D)

    def proj(x, w_ref, b_ref):
        # bf16 operands on the MXU, f32 accumulation; bias add in f32.
        return jnp.dot(x, w_ref[...], preferred_element_type=jnp.float32) + b_ref[...]

    Q = proj(xq, wq_ref, bq_ref)          # [rows, D] f32, already scaled by 1/sqrt(d_k)
    K = proj(xk, wk_ref, bk_ref)
    V = proj(xv, wv_ref, bv_ref)

    Q3 = Q.reshape(Bt, S, D)
    K3 = K.reshape(Bt, S, D)
    V3 = V.reshape(Bt, S, D)

    # Per-head attention.  Each head's context is written to its static column
    # slice of the VMEM scratch, which (a) bounds per-head live ranges and
    # (b) lets the output projection run as one wide K=D GEMM afterwards.
    # TODO(synk): for d_k < 128 the lane slices below imply XLU relayouts; at
    #             realistic (>=128-wide) heads they are lane-aligned and free.
    for hh in range(h):
        lo = hh * d_k
        qh = Q3[:, :, lo:lo + d_k].astype(jnp.bfloat16)   # [Bt, S, d_k]
        kh = K3[:, :, lo:lo + d_k].astype(jnp.bfloat16)
        vh = V3[:, :, lo:lo + d_k].astype(jnp.bfloat16)

        # scores: batched over Bt, contracting the last dims (no explicit transpose).
        s = jnp.einsum('bqd,bkd->bqk', qh, kh,
                       preferred_element_type=jnp.float32)   # [Bt, S, S] f32

        # Numerically-stable softmax in f32 (matches F.softmax); EUP reciprocal.
        s = s - jnp.max(s, axis=-1, keepdims=True)
        p = jnp.exp(s)
        p = p * pl.reciprocal(jnp.sum(p, axis=-1, keepdims=True), approx=True)

        ctx = jnp.einsum('bqk,bkd->bqd', p.astype(jnp.bfloat16), vh,
                         preferred_element_type=jnp.float32)  # [Bt, S, d_k] f32
        ctx_ref[:, lo:lo + d_k] = ctx.reshape(rows, d_k).astype(jnp.bfloat16)

    # Output projection: ONE wide [rows, D] x [D, D] bf16 GEMM (full MXU depth),
    # replacing h skinny K=d_k GEMMs; bias add in f32.
    out = jnp.dot(ctx_ref[...], wo_ref[...],
                  preferred_element_type=jnp.float32) + bo_ref[...]
    out_ref[...] = out.reshape(Bt, S, D).astype(out_ref.dtype)


def _pick_block_b(B, S):
    """~256 GEMM rows per grid step, but keep >= 2 grid steps (v7x has 2 TCs)."""
    cap = max(1, 256 // S)
    if B >= 2:
        cap = max(1, min(cap, B // 2))
    block_b = 1
    for c in range(min(B, cap), 0, -1):
        if B % c == 0:
            block_b = c
            break
    return block_b


def _vmem_limit_bytes(block_b, S, D):
    """Explicit VMEM budget for this tiling, clamped to the chip's physical VMEM."""
    rows = block_b * S
    est = (
        3 * 2 * rows * D * 2        # q/k/v bf16 tiles, double-buffered
        + 2 * rows * D * 4          # f32 output tile, double-buffered
        + 2 * 4 * D * D * 2         # four bf16 [D, D] weights, double-buffered
        + 2 * 4 * 8 * D * 4         # biases (sublane-padded), double-buffered
        + rows * D * 2              # ctx scratch
        + 4 * rows * D * 4          # Q/K/V f32 intermediates + f32 epilogue
        + 2 * rows * S * 4          # per-head scores / probs in flight
    )
    try:
        info = pltpu.get_tpu_info()
        phys = int(getattr(info, "vmem_capacity_bytes", 64 * 1024 * 1024))
    except Exception:
        phys = 64 * 1024 * 1024     # v7x lower bound
    # Leave ~30% of physical VMEM for Mosaic internal scratch / spills.
    return int(min(max(2 * est, 32 * 1024 * 1024), 0.7 * phys))


def multi_headed_attention(query, key, value, params, *, h, block_b=None):
    """params = dict with wq, bq, wk, bk, wv, bv, wo, bo.
    Weights are [D, D] (already transposed, input-major); biases are [1, D]."""
    B, S, D = query.shape
    assert D % h == 0
    d_k = D // h
    scale = 1.0 / math.sqrt(d_k)

    # Wrapper-side parameter prep (perf feedback):
    #  * fold 1/sqrt(d_k) into wq / bq  -> no in-kernel [rows, D] multiply
    #  * all projection weights shipped bf16 (they are MXU operands anyway)
    wq = (params["wq"] * scale).astype(jnp.bfloat16)
    bq = (params["bq"] * scale).astype(jnp.float32)
    wk = params["wk"].astype(jnp.bfloat16)
    bk = params["bk"].astype(jnp.float32)
    wv = params["wv"].astype(jnp.bfloat16)
    bv = params["bv"].astype(jnp.float32)
    wo = params["wo"].astype(jnp.bfloat16)
    bo = params["bo"].astype(jnp.float32)

    # Activations shipped bf16: they become bf16 MXU operands in-kernel anyway,
    # so this halves HBM->VMEM DMA with no extra precision loss.
    q_bf = query.astype(jnp.bfloat16)
    k_bf = key.astype(jnp.bfloat16)
    v_bf = value.astype(jnp.bfloat16)

    if block_b is None:
        block_b = _pick_block_b(B, S)
    assert B % block_b == 0

    act_in_spec = pl.BlockSpec((block_b, S, D), lambda b: (b, 0, 0))
    act_out_spec = pl.BlockSpec((block_b, S, D), lambda b: (b, 0, 0))
    # Grid-invariant weights / biases (constant index_map).
    w_spec = pl.BlockSpec((D, D), lambda b: (0, 0))
    b_spec = pl.BlockSpec((1, D), lambda b: (0, 0))

    grid = (B // block_b,)

    return pl.pallas_call(
        partial(mha_kernel, h=h, d_k=d_k),
        out_shape=jax.ShapeDtypeStruct((B, S, D), query.dtype),
        grid_spec=pltpu.PrefetchScalarGridSpec(
            num_scalar_prefetch=0,
            grid=grid,
            in_specs=[act_in_spec, act_in_spec, act_in_spec,
                      w_spec, b_spec, w_spec, b_spec,
                      w_spec, b_spec, w_spec, b_spec],
            out_specs=act_out_spec,
            scratch_shapes=[pltpu.VMEM((block_b * S, D), jnp.bfloat16)],
        ),
        compiler_params=pltpu.CompilerParams(
            dimension_semantics=("parallel",),
            vmem_limit_bytes=_vmem_limit_bytes(block_b, S, D)),
    )(q_bf, k_bf, v_bf,
      wq, bq, wk, bk, wv, bv, wo, bo)


def mha_reference(query, key, value, params, *, h):
    """Pure-JAX f32 reference mirroring the PyTorch forward (eval mode)."""
    B, S, D = query.shape
    d_k = D // h

    def lin(x, w, b):
        return x @ w + b[0]

    Q = lin(query, params["wq"], params["bq"]).reshape(B, S, h, d_k).transpose(0, 2, 1, 3)
    K = lin(key,   params["wk"], params["bk"]).reshape(B, S, h, d_k).transpose(0, 2, 1, 3)
    V = lin(value, params["wv"], params["bv"]).reshape(B, S, h, d_k).transpose(0, 2, 1, 3)

    scores = jnp.einsum("bhqd,bhkd->bhqk", Q, K) / math.sqrt(d_k)
    p = jax.nn.softmax(scores, axis=-1)
    x = jnp.einsum("bhqk,bhkd->bhqd", p, V)
    x = x.transpose(0, 2, 1, 3).reshape(B, S, D)
    return lin(x, params["wo"], params["bo"])


if __name__ == "__main__":
    B, S, D, H = 2, 8, 32, 4

    key0 = jax.random.PRNGKey(0)
    ks = jax.random.split(key0, 12)

    scale = 1.0 / math.sqrt(D)
    params = {
        "wq": jax.random.uniform(ks[0], (D, D), jnp.float32, -scale, scale),
        "bq": jax.random.uniform(ks[1], (1, D), jnp.float32, -scale, scale),
        "wk": jax.random.uniform(ks[2], (D, D), jnp.float32, -scale, scale),
        "bk": jax.random.uniform(ks[3], (1, D), jnp.float32, -scale, scale),
        "wv": jax.random.uniform(ks[4], (D, D), jnp.float32, -scale, scale),
        "bv": jax.random.uniform(ks[5], (1, D), jnp.float32, -scale, scale),
        "wo": jax.random.uniform(ks[6], (D, D), jnp.float32, -scale, scale),
        "bo": jax.random.uniform(ks[7], (1, D), jnp.float32, -scale, scale),
    }

    query = jax.random.normal(ks[8], (B, S, D), jnp.float32)
    key_in = jax.random.normal(ks[9], (B, S, D), jnp.float32)
    value = jax.random.normal(ks[10], (B, S, D), jnp.float32)

    out = multi_headed_attention(query, key_in, value, params, h=H)
    out = jax.block_until_ready(out)

    ref = mha_reference(query, key_in, value, params, h=H)
    assert out.shape == (B, S, D)
    # bf16 activations + bf16 MXU operands (perf feedback) -> compare against the
    # f32 reference with a correspondingly relaxed tolerance.
    assert jnp.allclose(out, ref, atol=2e-2, rtol=2e-2), "kernel does not match reference"

    print("KERNEL_OK")
</pallas_src>

<mosaic_0001>
module attributes {stable_mosaic.version = 11 : i64} {
  func.func @mha_kernel(%arg0: i32, %arg1: memref<1x8x32xbf16, #tpu.memory_space<vmem>>, %arg2: memref<1x8x32xbf16, #tpu.memory_space<vmem>>, %arg3: memref<1x8x32xbf16, #tpu.memory_space<vmem>>, %arg4: memref<32x32xbf16, #tpu.memory_space<vmem>>, %arg5: memref<1x32xf32, #tpu.memory_space<vmem>>, %arg6: memref<32x32xbf16, #tpu.memory_space<vmem>>, %arg7: memref<1x32xf32, #tpu.memory_space<vmem>>, %arg8: memref<32x32xbf16, #tpu.memory_space<vmem>>, %arg9: memref<1x32xf32, #tpu.memory_space<vmem>>, %arg10: memref<32x32xbf16, #tpu.memory_space<vmem>>, %arg11: memref<1x32xf32, #tpu.memory_space<vmem>>, %arg12: memref<1x8x32xf32, #tpu.memory_space<vmem>>, %arg13: memref<8x32xbf16, #tpu.memory_space<vmem>>) attributes {dimension_semantics = [#tpu.dimension_semantics<parallel>], iteration_bounds = array<i64: 2>, scalar_prefetch = 0 : i64, scratch_operands = 1 : i64, tpu.core_type = #tpu.core_type<tc>, window_params = [{transform_indices = @transform_0, window_bounds = array<i64: 1, 8, 32>}, {transform_indices = @transform_1, window_bounds = array<i64: 1, 8, 32>}, {transform_indices = @transform_2, window_bounds = array<i64: 1, 8, 32>}, {pipeline_mode = #tpu.pipeline_mode<synchronous>, transform_indices = @transform_3, window_bounds = array<i64: 32, 32>}, {pipeline_mode = #tpu.pipeline_mode<synchronous>, transform_indices = @transform_4, window_bounds = array<i64: 1, 32>}, {pipeline_mode = #tpu.pipeline_mode<synchronous>, transform_indices = @transform_5, window_bounds = array<i64: 32, 32>}, {pipeline_mode = #tpu.pipeline_mode<synchronous>, transform_indices = @transform_6, window_bounds = array<i64: 1, 32>}, {pipeline_mode = #tpu.pipeline_mode<synchronous>, transform_indices = @transform_7, window_bounds = array<i64: 32, 32>}, {pipeline_mode = #tpu.pipeline_mode<synchronous>, transform_indices = @transform_8, window_bounds = array<i64: 1, 32>}, {pipeline_mode = #tpu.pipeline_mode<synchronous>, transform_indices = @transform_9, window_bounds = array<i64: 32, 32>}, {pipeline_mode = #tpu.pipeline_mode<synchronous>, transform_indices = @transform_10, window_bounds = array<i64: 1, 32>}, {transform_indices = @transform_11, window_bounds = array<i64: 1, 8, 32>}]} {
    %c0 = arith.constant 0 : index
    %c0_0 = arith.constant 0 : index
    %c0_1 = arith.constant 0 : index
    %0 = vector.load %arg1[%c0, %c0_0, %c0_1] : memref<1x8x32xbf16, #tpu.memory_space<vmem>>, vector<1x8x32xbf16>
    %1 = vector.shape_cast %0 : vector<1x8x32xbf16> to vector<8x32xbf16>
    %c0_2 = arith.constant 0 : index
    %c0_3 = arith.constant 0 : index
    %c0_4 = arith.constant 0 : index
    %2 = vector.load %arg2[%c0_2, %c0_3, %c0_4] : memref<1x8x32xbf16, #tpu.memory_space<vmem>>, vector<1x8x32xbf16>
    %3 = vector.shape_cast %2 : vector<1x8x32xbf16> to vector<8x32xbf16>
    %c0_5 = arith.constant 0 : index
    %c0_6 = arith.constant 0 : index
    %c0_7 = arith.constant 0 : index
    %4 = vector.load %arg3[%c0_5, %c0_6, %c0_7] : memref<1x8x32xbf16, #tpu.memory_space<vmem>>, vector<1x8x32xbf16>
    %5 = vector.shape_cast %4 : vector<1x8x32xbf16> to vector<8x32xbf16>
    %c0_8 = arith.constant 0 : index
    %c0_9 = arith.constant 0 : index
    %6 = vector.load %arg4[%c0_8, %c0_9] : memref<32x32xbf16, #tpu.memory_space<vmem>>, vector<32x32xbf16>
    %cst = arith.constant dense<0.000000e+00> : vector<8x32xf32>
    %7 = tpu.matmul %1, %6, %cst {dimension_numbers = #tpu.dot_dimension_numbers<[1], [0], [0], [1], [0, 0, 1, 1], [], []>} : vector<8x32xbf16>, vector<32x32xbf16>, vector<8x32xf32> -> vector<8x32xf32>
    %c0_10 = arith.constant 0 : index
    %c0_11 = arith.constant 0 : index
    %8 = vector.load %arg5[%c0_10, %c0_11] : memref<1x32xf32, #tpu.memory_space<vmem>>, vector<1x32xf32>
    %9 = vector.broadcast %8 : vector<1x32xf32> to vector<8x32xf32>
    %10 = arith.addf %7, %9 : vector<8x32xf32>
    %c0_12 = arith.constant 0 : index
    %c0_13 = arith.constant 0 : index
    %11 = vector.load %arg6[%c0_12, %c0_13] : memref<32x32xbf16, #tpu.memory_space<vmem>>, vector<32x32xbf16>
    %cst_14 = arith.constant dense<0.000000e+00> : vector<8x32xf32>
    %12 = tpu.matmul %3, %11, %cst_14 {dimension_numbers = #tpu.dot_dimension_numbers<[1], [0], [0], [1], [0, 0, 1, 1], [], []>} : vector<8x32xbf16>, vector<32x32xbf16>, vector<8x32xf32> -> vector<8x32xf32>
    %c0_15 = arith.constant 0 : index
    %c0_16 = arith.constant 0 : index
    %13 = vector.load %arg7[%c0_15, %c0_16] : memref<1x32xf32, #tpu.memory_space<vmem>>, vector<1x32xf32>
    %14 = vector.broadcast %13 : vector<1x32xf32> to vector<8x32xf32>
    %15 = arith.addf %12, %14 : vector<8x32xf32>
    %c0_17 = arith.constant 0 : index
    %c0_18 = arith.constant 0 : index
    %16 = vector.load %arg8[%c0_17, %c0_18] : memref<32x32xbf16, #tpu.memory_space<vmem>>, vector<32x32xbf16>
    %cst_19 = arith.constant dense<0.000000e+00> : vector<8x32xf32>
    %17 = tpu.matmul %5, %16, %cst_19 {dimension_numbers = #tpu.dot_dimension_numbers<[1], [0], [0], [1], [0, 0, 1, 1], [], []>} : vector<8x32xbf16>, vector<32x32xbf16>, vector<8x32xf32> -> vector<8x32xf32>
    %c0_20 = arith.constant 0 : index
    %c0_21 = arith.constant 0 : index
    %18 = vector.load %arg9[%c0_20, %c0_21] : memref<1x32xf32, #tpu.memory_space<vmem>>, vector<1x32xf32>
    %19 = vector.broadcast %18 : vector<1x32xf32> to vector<8x32xf32>
    %20 = arith.addf %17, %19 : vector<8x32xf32>
    %21 = vector.shape_cast %10 : vector<8x32xf32> to vector<1x8x32xf32>
    %22 = vector.shape_cast %15 : vector<8x32xf32> to vector<1x8x32xf32>
    %23 = vector.shape_cast %20 : vector<8x32xf32> to vector<1x8x32xf32>
    %24 = vector.extract_strided_slice %21 {offsets = [0, 0, 0], sizes = [1, 8, 8], strides = [1, 1, 1]} : vector<1x8x32xf32> to vector<1x8x8xf32>
    %25 = arith.truncf %24 : vector<1x8x8xf32> to vector<1x8x8xbf16>
    %26 = vector.extract_strided_slice %22 {offsets = [0, 0, 0], sizes = [1, 8, 8], strides = [1, 1, 1]} : vector<1x8x32xf32> to vector<1x8x8xf32>
    %27 = arith.truncf %26 : vector<1x8x8xf32> to vector<1x8x8xbf16>
    %28 = vector.extract_strided_slice %23 {offsets = [0, 0, 0], sizes = [1, 8, 8], strides = [1, 1, 1]} : vector<1x8x32xf32> to vector<1x8x8xf32>
    %29 = arith.truncf %28 : vector<1x8x8xf32> to vector<1x8x8xbf16>
    "tpu.trace_start"() <{level = 10 : i32, message = "bqd,bkd->bqk"}> : () -> ()
    %cst_22 = arith.constant dense<0.000000e+00> : vector<1x8x8xf32>
    %30 = tpu.matmul %25, %27, %cst_22 {dimension_numbers = #tpu.dot_dimension_numbers<[2], [2], [1], [1], [0, 0, 0, 1, 1, 1], [0], [0]>} : vector<1x8x8xbf16>, vector<1x8x8xbf16>, vector<1x8x8xf32> -> vector<1x8x8xf32>
    "tpu.trace_stop"() : () -> ()
    %cst_23 = arith.constant dense<0xFF800000> : vector<1x8xf32>
    %31 = vector.multi_reduction <maximumf>, %30, %cst_23 [2] : vector<1x8x8xf32> to vector<1x8xf32>
    %32 = vector.shape_cast %31 : vector<1x8xf32> to vector<1x8x1xf32>
    %33 = vector.broadcast %32 : vector<1x8x1xf32> to vector<1x8x8xf32>
    %34 = arith.subf %30, %33 : vector<1x8x8xf32>
    %35 = math.exp %34 : vector<1x8x8xf32>
    %cst_24 = arith.constant dense<0.000000e+00> : vector<1x8xf32>
    %36 = vector.multi_reduction <add>, %35, %cst_24 [2] : vector<1x8x8xf32> to vector<1x8xf32>
    %37 = vector.shape_cast %36 : vector<1x8xf32> to vector<1x8x1xf32>
    %38 = tpu.reciprocal %37 {approx = true} : vector<1x8x1xf32> -> vector<1x8x1xf32>
    %39 = vector.broadcast %38 : vector<1x8x1xf32> to vector<1x8x8xf32>
    %40 = arith.mulf %35, %39 : vector<1x8x8xf32>
    %41 = arith.truncf %40 : vector<1x8x8xf32> to vector<1x8x8xbf16>
    "tpu.trace_start"() <{level = 10 : i32, message = "bqk,bkd->bqd"}> : () -> ()
    %cst_25 = arith.constant dense<0.000000e+00> : vector<1x8x8xf32>
    %42 = tpu.matmul %41, %29, %cst_25 {dimension_numbers = #tpu.dot_dimension_numbers<[2], [1], [1], [2], [0, 0, 0, 1, 1, 2], [0], [0]>} : vector<1x8x8xbf16>, vector<1x8x8xbf16>, vector<1x8x8xf32> -> vector<1x8x8xf32>
    "tpu.trace_stop"() : () -> ()
    %43 = vector.shape_cast %42 : vector<1x8x8xf32> to vector<8x8xf32>
    %44 = arith.truncf %43 : vector<8x8xf32> to vector<8x8xbf16>
    %c0_26 = arith.constant 0 : index
    %c0_27 = arith.constant 0 : index
    %45 = vector.load %arg13[%c0_26, %c0_27] : memref<8x32xbf16, #tpu.memory_space<vmem>>, vector<8x8xbf16>
    tpu.vector_store %arg13[%c0_26, %c0_27], %44 {strides = array<i32>} : memref<8x32xbf16, #tpu.memory_space<vmem>>, vector<8x8xbf16>,
    %46 = vector.extract_strided_slice %21 {offsets = [0, 0, 8], sizes = [1, 8, 8], strides = [1, 1, 1]} : vector<1x8x32xf32> to vector<1x8x8xf32>
    %47 = arith.truncf %46 : vector<1x8x8xf32> to vector<1x8x8xbf16>
    %48 = vector.extract_strided_slice %22 {offsets = [0, 0, 8], sizes = [1, 8, 8], strides = [1, 1, 1]} : vector<1x8x32xf32> to vector<1x8x8xf32>
    %49 = arith.truncf %48 : vector<1x8x8xf32> to vector<1x8x8xbf16>
    %50 = vector.extract_strided_slice %23 {offsets = [0, 0, 8], sizes = [1, 8, 8], strides = [1, 1, 1]} : vector<1x8x32xf32> to vector<1x8x8xf32>
    %51 = arith.truncf %50 : vector<1x8x8xf32> to vector<1x8x8xbf16>
    "tpu.trace_start"() <{level = 10 : i32, message = "bqd,bkd->bqk"}> : () -> ()
    %cst_28 = arith.constant dense<0.000000e+00> : vector<1x8x8xf32>
    %52 = tpu.matmul %47, %49, %cst_28 {dimension_numbers = #tpu.dot_dimension_numbers<[2], [2], [1], [1], [0, 0, 0, 1, 1, 1], [0], [0]>} : vector<1x8x8xbf16>, vector<1x8x8xbf16>, vector<1x8x8xf32> -> vector<1x8x8xf32>
    "tpu.trace_stop"() : () -> ()
    %cst_29 = arith.constant dense<0xFF800000> : vector<1x8xf32>
    %53 = vector.multi_reduction <maximumf>, %52, %cst_29 [2] : vector<1x8x8xf32> to vector<1x8xf32>
    %54 = vector.shape_cast %53 : vector<1x8xf32> to vector<1x8x1xf32>
    %55 = vector.broadcast %54 : vector<1x8x1xf32> to vector<1x8x8xf32>
    %56 = arith.subf %52, %55 : vector<1x8x8xf32>
    %57 = math.exp %56 : vector<1x8x8xf32>
    %cst_30 = arith.constant dense<0.000000e+00> : vector<1x8xf32>
    %58 = vector.multi_reduction <add>, %57, %cst_30 [2] : vector<1x8x8xf32> to vector<1x8xf32>
    %59 = vector.shape_cast %58 : vector<1x8xf32> to vector<1x8x1xf32>
    %60 = tpu.reciprocal %59 {approx = true} : vector<1x8x1xf32> -> vector<1x8x1xf32>
    %61 = vector.broadcast %60 : vector<1x8x1xf32> to vector<1x8x8xf32>
    %62 = arith.mulf %57, %61 : vector<1x8x8xf32>
    %63 = arith.truncf %62 : vector<1x8x8xf32> to vector<1x8x8xbf16>
    "tpu.trace_start"() <{level = 10 : i32, message = "bqk,bkd->bqd"}> : () -> ()
    %cst_31 = arith.constant dense<0.000000e+00> : vector<1x8x8xf32>
    %64 = tpu.matmul %63, %51, %cst_31 {dimension_numbers = #tpu.dot_dimension_numbers<[2], [1], [1], [2], [0, 0, 0, 1, 1, 2], [0], [0]>} : vector<1x8x8xbf16>, vector<1x8x8xbf16>, vector<1x8x8xf32> -> vector<1x8x8xf32>
    "tpu.trace_stop"() : () -> ()
    %65 = vector.shape_cast %64 : vector<1x8x8xf32> to vector<8x8xf32>
    %66 = arith.truncf %65 : vector<8x8xf32> to vector<8x8xbf16>
    %c0_32 = arith.constant 0 : index
    %c8 = arith.constant 8 : index
    %67 = vector.load %arg13[%c0_32, %c8] : memref<8x32xbf16, #tpu.memory_space<vmem>>, vector<8x8xbf16>
    tpu.vector_store %arg13[%c0_32, %c8], %66 {strides = array<i32>} : memref<8x32xbf16, #tpu.memory_space<vmem>>, vector<8x8xbf16>,
    %68 = vector.extract_strided_slice %21 {offsets = [0, 0, 16], sizes = [1, 8, 8], strides = [1, 1, 1]} : vector<1x8x32xf32> to vector<1x8x8xf32>
    %69 = arith.truncf %68 : vector<1x8x8xf32> to vector<1x8x8xbf16>
    %70 = vector.extract_strided_slice %22 {offsets = [0, 0, 16], sizes = [1, 8, 8], strides = [1, 1, 1]} : vector<1x8x32xf32> to vector<1x8x8xf32>
    %71 = arith.truncf %70 : vector<1x8x8xf32> to vector<1x8x8xbf16>
    %72 = vector.extract_strided_slice %23 {offsets = [0, 0, 16], sizes = [1, 8, 8], strides = [1, 1, 1]} : vector<1x8x32xf32> to vector<1x8x8xf32>
    %73 = arith.truncf %72 : vector<1x8x8xf32> to vector<1x8x8xbf16>
    "tpu.trace_start"() <{level = 10 : i32, message = "bqd,bkd->bqk"}> : () -> ()
    %cst_33 = arith.constant dense<0.000000e+00> : vector<1x8x8xf32>
    %74 = tpu.matmul %69, %71, %cst_33 {dimension_numbers = #tpu.dot_dimension_numbers<[2], [2], [1], [1], [0, 0, 0, 1, 1, 1], [0], [0]>} : vector<1x8x8xbf16>, vector<1x8x8xbf16>, vector<1x8x8xf32> -> vector<1x8x8xf32>
    "tpu.trace_stop"() : () -> ()
    %cst_34 = arith.constant dense<0xFF800000> : vector<1x8xf32>
    %75 = vector.multi_reduction <maximumf>, %74, %cst_34 [2] : vector<1x8x8xf32> to vector<1x8xf32>
    %76 = vector.shape_cast %75 : vector<1x8xf32> to vector<1x8x1xf32>
    %77 = vector.broadcast %76 : vector<1x8x1xf32> to vector<1x8x8xf32>
    %78 = arith.subf %74, %77 : vector<1x8x8xf32>
    %79 = math.exp %78 : vector<1x8x8xf32>
    %cst_35 = arith.constant dense<0.000000e+00> : vector<1x8xf32>
    %80 = vector.multi_reduction <add>, %79, %cst_35 [2] : vector<1x8x8xf32> to vector<1x8xf32>
    %81 = vector.shape_cast %80 : vector<1x8xf32> to vector<1x8x1xf32>
    %82 = tpu.reciprocal %81 {approx = true} : vector<1x8x1xf32> -> vector<1x8x1xf32>
    %83 = vector.broadcast %82 : vector<1x8x1xf32> to vector<1x8x8xf32>
    %84 = arith.mulf %79, %83 : vector<1x8x8xf32>
    %85 = arith.truncf %84 : vector<1x8x8xf32> to vector<1x8x8xbf16>
    "tpu.trace_start"() <{level = 10 : i32, message = "bqk,bkd->bqd"}> : () -> ()
    %cst_36 = arith.constant dense<0.000000e+00> : vector<1x8x8xf32>
    %86 = tpu.matmul %85, %73, %cst_36 {dimension_numbers = #tpu.dot_dimension_numbers<[2], [1], [1], [2], [0, 0, 0, 1, 1, 2], [0], [0]>} : vector<1x8x8xbf16>, vector<1x8x8xbf16>, vector<1x8x8xf32> -> vector<1x8x8xf32>
    "tpu.trace_stop"() : () -> ()
    %87 = vector.shape_cast %86 : vector<1x8x8xf32> to vector<8x8xf32>
    %88 = arith.truncf %87 : vector<8x8xf32> to vector<8x8xbf16>
    %c0_37 = arith.constant 0 : index
    %c16 = arith.constant 16 : index
    %89 = vector.load %arg13[%c0_37, %c16] : memref<8x32xbf16, #tpu.memory_space<vmem>>, vector<8x8xbf16>
    tpu.vector_store %arg13[%c0_37, %c16], %88 {strides = array<i32>} : memref<8x32xbf16, #tpu.memory_space<vmem>>, vector<8x8xbf16>,
    %90 = vector.extract_strided_slice %21 {offsets = [0, 0, 24], sizes = [1, 8, 8], strides = [1, 1, 1]} : vector<1x8x32xf32> to vector<1x8x8xf32>
    %91 = arith.truncf %90 : vector<1x8x8xf32> to vector<1x8x8xbf16>
    %92 = vector.extract_strided_slice %22 {offsets = [0, 0, 24], sizes = [1, 8, 8], strides = [1, 1, 1]} : vector<1x8x32xf32> to vector<1x8x8xf32>
    %93 = arith.truncf %92 : vector<1x8x8xf32> to vector<1x8x8xbf16>
    %94 = vector.extract_strided_slice %23 {offsets = [0, 0, 24], sizes = [1, 8, 8], strides = [1, 1, 1]} : vector<1x8x32xf32> to vector<1x8x8xf32>
    %95 = arith.truncf %94 : vector<1x8x8xf32> to vector<1x8x8xbf16>
    "tpu.trace_start"() <{level = 10 : i32, message = "bqd,bkd->bqk"}> : () -> ()
    %cst_38 = arith.constant dense<0.000000e+00> : vector<1x8x8xf32>
    %96 = tpu.matmul %91, %93, %cst_38 {dimension_numbers = #tpu.dot_dimension_numbers<[2], [2], [1], [1], [0, 0, 0, 1, 1, 1], [0], [0]>} : vector<1x8x8xbf16>, vector<1x8x8xbf16>, vector<1x8x8xf32> -> vector<1x8x8xf32>
    "tpu.trace_stop"() : () -> ()
    %cst_39 = arith.constant dense<0xFF800000> : vector<1x8xf32>
    %97 = vector.multi_reduction <maximumf>, %96, %cst_39 [2] : vector<1x8x8xf32> to vector<1x8xf32>
    %98 = vector.shape_cast %97 : vector<1x8xf32> to vector<1x8x1xf32>
    %99 = vector.broadcast %98 : vector<1x8x1xf32> to vector<1x8x8xf32>
    %100 = arith.subf %96, %99 : vector<1x8x8xf32>
    %101 = math.exp %100 : vector<1x8x8xf32>
    %cst_40 = arith.constant dense<0.000000e+00> : vector<1x8xf32>
    %102 = vector.multi_reduction <add>, %101, %cst_40 [2] : vector<1x8x8xf32> to vector<1x8xf32>
    %103 = vector.shape_cast %102 : vector<1x8xf32> to vector<1x8x1xf32>
    %104 = tpu.reciprocal %103 {approx = true} : vector<1x8x1xf32> -> vector<1x8x1xf32>
    %105 = vector.broadcast %104 : vector<1x8x1xf32> to vector<1x8x8xf32>
    %106 = arith.mulf %101, %105 : vector<1x8x8xf32>
    %107 = arith.truncf %106 : vector<1x8x8xf32> to vector<1x8x8xbf16>
    "tpu.trace_start"() <{level = 10 : i32, message = "bqk,bkd->bqd"}> : () -> ()
    %cst_41 = arith.constant dense<0.000000e+00> : vector<1x8x8xf32>
    %108 = tpu.matmul %107, %95, %cst_41 {dimension_numbers = #tpu.dot_dimension_numbers<[2], [1], [1], [2], [0, 0, 0, 1, 1, 2], [0], [0]>} : vector<1x8x8xbf16>, vector<1x8x8xbf16>, vector<1x8x8xf32> -> vector<1x8x8xf32>
    "tpu.trace_stop"() : () -> ()
    %109 = vector.shape_cast %108 : vector<1x8x8xf32> to vector<8x8xf32>
    %110 = arith.truncf %109 : vector<8x8xf32> to vector<8x8xbf16>
    %c0_42 = arith.constant 0 : index
    %c24 = arith.constant 24 : index
    %111 = vector.load %arg13[%c0_42, %c24] : memref<8x32xbf16, #tpu.memory_space<vmem>>, vector<8x8xbf16>
    tpu.vector_store %arg13[%c0_42, %c24], %110 {strides = array<i32>} : memref<8x32xbf16, #tpu.memory_space<vmem>>, vector<8x8xbf16>,
    %c0_43 = arith.constant 0 : index
    %c0_44 = arith.constant 0 : index
    %112 = vector.load %arg13[%c0_43, %c0_44] : memref<8x32xbf16, #tpu.memory_space<vmem>>, vector<8x32xbf16>
    %c0_45 = arith.constant 0 : index
    %c0_46 = arith.constant 0 : index
    %113 = vector.load %arg10[%c0_45, %c0_46] : memref<32x32xbf16, #tpu.memory_space<vmem>>, vector<32x32xbf16>
    %cst_47 = arith.constant dense<0.000000e+00> : vector<8x32xf32>
    %114 = tpu.matmul %112, %113, %cst_47 {dimension_numbers = #tpu.dot_dimension_numbers<[1], [0], [0], [1], [0, 0, 1, 1], [], []>} : vector<8x32xbf16>, vector<32x32xbf16>, vector<8x32xf32> -> vector<8x32xf32>
    %c0_48 = arith.constant 0 : index
    %c0_49 = arith.constant 0 : index
    %115 = vector.load %arg11[%c0_48, %c0_49] : memref<1x32xf32, #tpu.memory_space<vmem>>, vector<1x32xf32>
    %116 = vector.broadcast %115 : vector<1x32xf32> to vector<8x32xf32>
    %117 = arith.addf %114, %116 : vector<8x32xf32>
    %118 = vector.shape_cast %117 : vector<8x32xf32> to vector<1x8x32xf32>
    %c0_50 = arith.constant 0 : index
    %c0_51 = arith.constant 0 : index
    %c0_52 = arith.constant 0 : index
    %119 = vector.load %arg12[%c0_50, %c0_51, %c0_52] : memref<1x8x32xf32, #tpu.memory_space<vmem>>, vector<1x8x32xf32>
    tpu.vector_store %arg12[%c0_50, %c0_51, %c0_52], %118 {strides = array<i32>} : memref<1x8x32xf32, #tpu.memory_space<vmem>>, vector<1x8x32xf32>,
    return
  }
  func.func @transform_0(%arg0: i32) -> (i32, i32, i32) {
    %c0_i32 = arith.constant 0 : i32
    %c0_i32_0 = arith.constant 0 : i32
    %c0_i32_1 = arith.constant 0 : i32
    return %arg0, %c0_i32, %c0_i32_0 : i32, i32, i32
  }
  func.func @transform_1(%arg0: i32) -> (i32, i32, i32) {
    %c0_i32 = arith.constant 0 : i32
    %c0_i32_0 = arith.constant 0 : i32
    %c0_i32_1 = arith.constant 0 : i32
    return %arg0, %c0_i32, %c0_i32_0 : i32, i32, i32
  }
  func.func @transform_2(%arg0: i32) -> (i32, i32, i32) {
    %c0_i32 = arith.constant 0 : i32
    %c0_i32_0 = arith.constant 0 : i32
    %c0_i32_1 = arith.constant 0 : i32
    return %arg0, %c0_i32, %c0_i32_0 : i32, i32, i32
  }
  func.func @transform_3(%arg0: i32) -> (i32, i32) {
    %c0_i32 = arith.constant 0 : i32
    %c0_i32_0 = arith.constant 0 : i32
    %c0_i32_1 = arith.constant 0 : i32
    return %c0_i32, %c0_i32_0 : i32, i32
  }
  func.func @transform_4(%arg0: i32) -> (i32, i32) {
    %c0_i32 = arith.constant 0 : i32
    %c0_i32_0 = arith.constant 0 : i32
    %c0_i32_1 = arith.constant 0 : i32
    return %c0_i32, %c0_i32_0 : i32, i32
  }
  func.func @transform_5(%arg0: i32) -> (i32, i32) {
    %c0_i32 = arith.constant 0 : i32
    %c0_i32_0 = arith.constant 0 : i32
    %c0_i32_1 = arith.constant 0 : i32
    return %c0_i32, %c0_i32_0 : i32, i32
  }
  func.func @transform_6(%arg0: i32) -> (i32, i32) {
    %c0_i32 = arith.constant 0 : i32
    %c0_i32_0 = arith.constant 0 : i32
    %c0_i32_1 = arith.constant 0 : i32
    return %c0_i32, %c0_i32_0 : i32, i32
  }
  func.func @transform_7(%arg0: i32) -> (i32, i32) {
    %c0_i32 = arith.constant 0 : i32
    %c0_i32_0 = arith.constant 0 : i32
    %c0_i32_1 = arith.constant 0 : i32
    return %c0_i32, %c0_i32_0 : i32, i32
  }
  func.func @transform_8(%arg0: i32) -> (i32, i32) {
    %c0_i32 = arith.constant 0 : i32
    %c0_i32_0 = arith.constant 0 : i32
    %c0_i32_1 = arith.constant 0 : i32
    return %c0_i32, %c0_i32_0 : i32, i32
  }
  func.func @transform_9(%arg0: i32) -> (i32, i32) {
    %c0_i32 = arith.constant 0 : i32
    %c0_i32_0 = arith.constant 0 : i32
    %c0_i32_1 = arith.constant 0 : i32
    return %c0_i32, %c0_i32_0 : i32, i32
  }
  func.func @transform_10(%arg0: i32) -> (i32, i32) {
    %c0_i32 = arith.constant 0 : i32
    %c0_i32_0 = arith.constant 0 : i32
    %c0_i32_1 = arith.constant 0 : i32
    return %c0_i32, %c0_i32_0 : i32, i32
  }
  func.func @transform_11(%arg0: i32) -> (i32, i32, i32) {
    %c0_i32 = arith.constant 0 : i32
    %c0_i32_0 = arith.constant 0 : i32
    %c0_i32_1 = arith.constant 0 : i32
    return %arg0, %c0_i32, %c0_i32_0 : i32, i32, i32
  }
}

</mosaic_0001>

<llo_original>
// kernel: tpu_custom_call.1
$region0: #{tpu_custom_call.1}
  #allocation0 [shape = 'u32[]', space=smem, size = 0x4, offset = 0x4, fixed_abs, tag = 'smem constant byte address 0x4 - core index']
  #allocation1 [shape = 'u32[144,128]{1,0:T(1,128)}', space=vmem, size = 0x12000, scoped, tag = 'internal scratch']
  #allocation2 [shape = 'bf16[8,32]{1,0:T(8,128)(2,1)}', space=vmem, size = 0x800, scoped, tag = 'scratch operand']
  %s0 = inlined_call_operand.hbm [shape: bf16[2,8,32], index: 0, kind: input, shape index: {}]
  %s1 = inlined_call_operand.hbm [shape: bf16[2,8,32], index: 1, kind: input, shape index: {}]
  %s2 = inlined_call_operand.hbm [shape: bf16[2,8,32], index: 2, kind: input, shape index: {}]
  %s3 = inlined_call_operand.hbm [shape: bf16[32,32], index: 3, kind: input, shape index: {}]
  %s4 = inlined_call_operand.vmem [shape: f32[1,32], index: 4, kind: input, shape index: {}]
  %s5 = inlined_call_operand.vmem [shape: bf16[32,32], index: 5, kind: input, shape index: {}]
  %s6 = inlined_call_operand.vmem [shape: f32[1,32], index: 6, kind: input, shape index: {}]
  %s7 = inlined_call_operand.hbm [shape: bf16[32,32], index: 7, kind: input, shape index: {}]
  %s8 = inlined_call_operand.hbm [shape: f32[1,32], index: 8, kind: input, shape index: {}]
  %s9 = inlined_call_operand.vmem [shape: bf16[32,32], index: 9, kind: input, shape index: {}]
  %s10 = inlined_call_operand.vmem [shape: f32[1,32], index: 10, kind: input, shape index: {}]
  %s11 = inlined_call_operand.hbm [shape: f32[2,8,32], index: 11, kind: output, shape index: {}]
  %s12 = sld [smem:[#allocation0]]
  $region101: #{tpu_custom_call.1} parent=0
    _
  %s14 = ssub.s32 1, %s12
  %s15 = scalar_select 0, %s14, %s12
  $region1: #{tpu_custom_call.1} parent=0
    #allocation3 [shape = 'u8[4096]{0}', space=vmem, size = 0x1000, scoped, tag = 'input window, operand 0']
    #allocation4 [shape = 's32[2]{0}', space=sflag, size = 0x8, scoped, tag = 'scoped memory for tpu_custom_call.1']
    #allocation5 [shape = 's32[2]{0}', space=sflag, size = 0x8, scoped, tag = 'scoped memory for tpu_custom_call.1']
    #allocation6 [shape = 'u8[4096]{0}', space=vmem, size = 0x1000, scoped, tag = 'input window, operand 1']
    #allocation7 [shape = 's32[2]{0}', space=sflag, size = 0x8, scoped, tag = 'scoped memory for tpu_custom_call.1']
    #allocation8 [shape = 'u8[4096]{0}', space=vmem, size = 0x1000, scoped, tag = 'input window, operand 2']
    #allocation9 [shape = 'u8[8192]{0}', space=vmem, size = 0x2000, scoped, tag = 'input window, operand 3, single buffered']
    #allocation10 [shape = 's32[1]{0}', space=sflag, size = 0x4, scoped, tag = 'scoped memory for tpu_custom_call.1']
    #allocation11 [shape = 'u8[8192]{0}', space=vmem, size = 0x2000, scoped, tag = 'input window, operand 7, single buffered']
    #allocation12 [shape = 'u8[512]{0}', space=vmem, size = 0x400, scoped, tag = 'input window, operand 8, single buffered']
    #allocation13 [shape = 's32[1]{0}', space=sflag, size = 0x4, scoped, tag = 'scoped memory for tpu_custom_call.1']
    #allocation14 [shape = 'u8[8192]{0}', space=vmem, size = 0x2000, scoped, tag = 'output window, operand 0']
    %16 = vsyncpa [#allocation4], 0
    %s17 = scalar_lea.sflag [#allocation4], 1
    %18 = vsyncpa %s17, 0
    %19 = vsyncpa [#allocation7], 0
    %s20 = scalar_lea.sflag [#allocation7], 1
    %21 = vsyncpa %s20, 0
    %22 = vsyncpa [#allocation10], 0
    %23 = vsyncpa [#allocation13], 0
    %24 = vsyncpa [#allocation5], 0
    %s25 = scalar_lea.sflag [#allocation5], 1
    %26 = vsyncpa %s25, 0
    loop: start=0, step=1, limit=4
    $region2: #{tpu_custom_call.1} parent=1 // loop_pre_header
      _
    $region3: #{tpu_custom_call.1} parent=1 // loop_header
      %s28 = sphi 0, %s32
      %p29 = scmp.ge.s32.totalorder %s28, 4
      %s38 = sphi 0, %s40
      %s41 = sphi 0, %s38
      %s42 = sphi 0, %s41
      %s58 = sphi 0, %s42
      %s64 = sphi 0, %s66
      %s67 = sphi 0, %s64
      %s68 = sphi 0, %s67
      %s84 = sphi 0, %s68
      %s90 = sphi 0, %s92
      %s93 = sphi 0, %s90
      %s94 = sphi 0, %s93
      %s110 = sphi 0, %s94
      %s114 = sphi 0, %s114
      %s116 = sphi 0, %s114
      %s117 = sphi 0, %s116
      %s131 = sphi 0, %s117
      %s135 = sphi 0, %s135
      %s137 = sphi 0, %s135
      %s138 = sphi 0, %s137
      %s152 = sphi 0, %s138
      %s156 = sphi 0, %s156
      %s158 = sphi 0, %s156
      %s159 = sphi 0, %s158
      %s173 = sphi 0, %s159
      %s177 = sphi 0, %s177
      %s179 = sphi 0, %s177
      %s180 = sphi 0, %s179
      %s194 = sphi 0, %s180
      %s198 = sphi 0, %s198
      %s200 = sphi 0, %s198
      %s201 = sphi 0, %s200
      %s215 = sphi 0, %s201
      %s219 = sphi 0, %s219
      %s221 = sphi 0, %s219
      %s222 = sphi 0, %s221
      %s236 = sphi 0, %s222
      %s240 = sphi 0, %s240
      %s242 = sphi 0, %s240
      %s243 = sphi 0, %s242
      %s257 = sphi 0, %s243
      %s261 = sphi 0, %s261
      %s263 = sphi 0, %s261
      %s264 = sphi 0, %s263
      %s278 = sphi 0, %s264
      %s284 = sphi 0, %s286
      %s287 = sphi 0, %s284
      %s288 = sphi 0, %s287
      %s304 = sphi 0, %s288
    $region4: #{tpu_custom_call.1} parent=1 // loop_header_branch
      %31 = sbr.rel (%p29) target = $region8
    $region5: #{tpu_custom_call.1} parent=1 // loop_body
      %s33 = ssub.s32 %s28, 1
      %s34 = ssub.s32 %s28, 2
      %s35 = sadd.s32 %s28, 1
      %s36 = ssub.s32 %s28, %s35
      %p37 = scmp.eq.s32.totalorder %s36, 0
      %s39 = sadd.s32 %s38, 1
      %s40 = scalar_select %p37, %s38, %s39
      %p43 = pneg %p37
      %p44 = scmp.eq.s32.totalorder %s28, 1
      %p45 = por %p43, %p44
      %p46 = scmp.ne.s32.totalorder %s38, %s41
      %p47 = scmp.eq.s32.totalorder %s28, 0
      %p48 = por %p46, %p47
      %p49 = scmp.ne.s32.totalorder %s38, %s41
      %p50 = scmp.eq.s32.totalorder %s33, 1
      %p51 = por %p49, %p50
      %p52 = scmp.ne.s32.totalorder %s41, %s42
      %p53 = scmp.eq.s32.totalorder %s33, 0
      %p54 = por %p52, %p53
      %p55 = scmp.ne.s32.totalorder %s41, %s42
      %p56 = scmp.eq.s32.totalorder %s34, 1
      %p57 = por %p55, %p56
      %p59 = scmp.ne.s32.totalorder %s42, %s58
      %p60 = scmp.eq.s32.totalorder %s34, 0
      %p61 = por %p59, %p60
      %s62 = ssub.s32 %s28, %s35
      %p63 = scmp.eq.s32.totalorder %s62, 0
      %s65 = sadd.s32 %s64, 1
      %s66 = scalar_select %p63, %s64, %s65
      %p69 = pneg %p63
      %p70 = scmp.eq.s32.totalorder %s28, 1
      %p71 = por %p69, %p70
      %p72 = scmp.ne.s32.totalorder %s64, %s67
      %p73 = scmp.eq.s32.totalorder %s28, 0
      %p74 = por %p72, %p73
      %p75 = scmp.ne.s32.totalorder %s64, %s67
      %p76 = scmp.eq.s32.totalorder %s33, 1
      %p77 = por %p75, %p76
      %p78 = scmp.ne.s32.totalorder %s67, %s68
      %p79 = scmp.eq.s32.totalorder %s33, 0
      %p80 = por %p78, %p79
      %p81 = scmp.ne.s32.totalorder %s67, %s68
      %p82 = scmp.eq.s32.totalorder %s34, 1
      %p83 = por %p81, %p82
      %p85 = scmp.ne.s32.totalorder %s68, %s84
      %p86 = scmp.eq.s32.totalorder %s34, 0
      %p87 = por %p85, %p86
      %s88 = ssub.s32 %s28, %s35
      %p89 = scmp.eq.s32.totalorder %s88, 0
      %s91 = sadd.s32 %s90, 1
      %s92 = scalar_select %p89, %s90, %s91
      %p95 = pneg %p89
      %p96 = scmp.eq.s32.totalorder %s28, 1
      %p97 = por %p95, %p96
      %p98 = scmp.ne.s32.totalorder %s90, %s93
      %p99 = scmp.eq.s32.totalorder %s28, 0
      %p100 = por %p98, %p99
      %p101 = scmp.ne.s32.totalorder %s90, %s93
      %p102 = scmp.eq.s32.totalorder %s33, 1
      %p103 = por %p101, %p102
      %p104 = scmp.ne.s32.totalorder %s93, %s94
      %p105 = scmp.eq.s32.totalorder %s33, 0
      %p106 = por %p104, %p105
      %p107 = scmp.ne.s32.totalorder %s93, %s94
      %p108 = scmp.eq.s32.totalorder %s34, 1
      %p109 = por %p107, %p108
      %p111 = scmp.ne.s32.totalorder %s94, %s110
      %p112 = scmp.eq.s32.totalorder %s34, 0
      %p113 = por %p111, %p112
      %s115 = sadd.s32 %s114, 1
      %p118 = scmp.eq.s32.totalorder %s28, 1
      %p119 = scmp.ne.s32.totalorder %s114, %s116
      %p120 = scmp.eq.s32.totalorder %s28, 0
      %p121 = por %p119, %p120
      %p122 = scmp.ne.s32.totalorder %s114, %s116
      %p123 = scmp.eq.s32.totalorder %s33, 1
      %p124 = por %p122, %p123
      %p125 = scmp.ne.s32.totalorder %s116, %s117
      %p126 = scmp.eq.s32.totalorder %s33, 0
      %p127 = por %p125, %p126
      %p128 = scmp.ne.s32.totalorder %s116, %s117
      %p129 = scmp.eq.s32.totalorder %s34, 1
      %p130 = por %p128, %p129
      %p132 = scmp.ne.s32.totalorder %s117, %s131
      %p133 = scmp.eq.s32.totalorder %s34, 0
      %p134 = por %p132, %p133
      %s136 = sadd.s32 %s135, 1
      %p139 = scmp.eq.s32.totalorder %s28, 1
      %p140 = scmp.ne.s32.totalorder %s135, %s137
      %p141 = scmp.eq.s32.totalorder %s28, 0
      %p142 = por %p140, %p141
      %p143 = scmp.ne.s32.totalorder %s135, %s137
      %p144 = scmp.eq.s32.totalorder %s33, 1
      %p145 = por %p143, %p144
      %p146 = scmp.ne.s32.totalorder %s137, %s138
      %p147 = scmp.eq.s32.totalorder %s33, 0
      %p148 = por %p146, %p147
      %p149 = scmp.ne.s32.totalorder %s137, %s138
      %p150 = scmp.eq.s32.totalorder %s34, 1
      %p151 = por %p149, %p150
      %p153 = scmp.ne.s32.totalorder %s138, %s152
      %p154 = scmp.eq.s32.totalorder %s34, 0
      %p155 = por %p153, %p154
      %s157 = sadd.s32 %s156, 1
      %p160 = scmp.eq.s32.totalorder %s28, 1
      %p161 = scmp.ne.s32.totalorder %s156, %s158
      %p162 = scmp.eq.s32.totalorder %s28, 0
      %p163 = por %p161, %p162
      %p164 = scmp.ne.s32.totalorder %s156, %s158
      %p165 = scmp.eq.s32.totalorder %s33, 1
      %p166 = por %p164, %p165
      %p167 = scmp.ne.s32.totalorder %s158, %s159
      %p168 = scmp.eq.s32.totalorder %s33, 0
      %p169 = por %p167, %p168
      %p170 = scmp.ne.s32.totalorder %s158, %s159
      %p171 = scmp.eq.s32.totalorder %s34, 1
      %p172 = por %p170, %p171
      %p174 = scmp.ne.s32.totalorder %s159, %s173
      %p175 = scmp.eq.s32.totalorder %s34, 0
      %p176 = por %p174, %p175
      %s178 = sadd.s32 %s177, 1
      %p181 = scmp.eq.s32.totalorder %s28, 1
      %p182 = scmp.ne.s32.totalorder %s177, %s179
      %p183 = scmp.eq.s32.totalorder %s28, 0
      %p184 = por %p182, %p183
      %p185 = scmp.ne.s32.totalorder %s177, %s179
      %p186 = scmp.eq.s32.totalorder %s33, 1
      %p187 = por %p185, %p186
      %p188 = scmp.ne.s32.totalorder %s179, %s180
      %p189 = scmp.eq.s32.totalorder %s33, 0
      %p190 = por %p188, %p189
      %p191 = scmp.ne.s32.totalorder %s179, %s180
      %p192 = scmp.eq.s32.totalorder %s34, 1
      %p193 = por %p191, %p192
      %p195 = scmp.ne.s32.totalorder %s180, %s194
      %p196 = scmp.eq.s32.totalorder %s34, 0
      %p197 = por %p195, %p196
      %s199 = sadd.s32 %s198, 1
      %p202 = scmp.eq.s32.totalorder %s28, 1
      %p203 = scmp.ne.s32.totalorder %s198, %s200
      %p204 = scmp.eq.s32.totalorder %s28, 0
      %p205 = por %p203, %p204
      %p206 = scmp.ne.s32.totalorder %s198, %s200
      %p207 = scmp.eq.s32.totalorder %s33, 1
      %p208 = por %p206, %p207
      %p209 = scmp.ne.s32.totalorder %s200, %s201
      %p210 = scmp.eq.s32.totalorder %s33, 0
      %p211 = por %p209, %p210
      %p212 = scmp.ne.s32.totalorder %s200, %s201
      %p213 = scmp.eq.s32.totalorder %s34, 1
      %p214 = por %p212, %p213
      %p216 = scmp.ne.s32.totalorder %s201, %s215
      %p217 = scmp.eq.s32.totalorder %s34, 0
      %p218 = por %p216, %p217
      %s220 = sadd.s32 %s219, 1
      %p223 = scmp.eq.s32.totalorder %s28, 1
      %p224 = scmp.ne.s32.totalorder %s219, %s221
      %p225 = scmp.eq.s32.totalorder %s28, 0
      %p226 = por %p224, %p225
      %p227 = scmp.ne.s32.totalorder %s219, %s221
      %p228 = scmp.eq.s32.totalorder %s33, 1
      %p229 = por %p227, %p228
      %p230 = scmp.ne.s32.totalorder %s221, %s222
      %p231 = scmp.eq.s32.totalorder %s33, 0
      %p232 = por %p230, %p231
      %p233 = scmp.ne.s32.totalorder %s221, %s222
      %p234 = scmp.eq.s32.totalorder %s34, 1
      %p235 = por %p233, %p234
      %p237 = scmp.ne.s32.totalorder %s222, %s236
      %p238 = scmp.eq.s32.totalorder %s34, 0
      %p239 = por %p237, %p238
      %s241 = sadd.s32 %s240, 1
      %p244 = scmp.eq.s32.totalorder %s28, 1
      %p245 = scmp.ne.s32.totalorder %s240, %s242
      %p246 = scmp.eq.s32.totalorder %s28, 0
      %p247 = por %p245, %p246
      %p248 = scmp.ne.s32.totalorder %s240, %s242
      %p249 = scmp.eq.s32.totalorder %s33, 1
      %p250 = por %p248, %p249
      %p251 = scmp.ne.s32.totalorder %s242, %s243
      %p252 = scmp.eq.s32.totalorder %s33, 0
      %p253 = por %p251, %p252
      %p254 = scmp.ne.s32.totalorder %s242, %s243
      %p255 = scmp.eq.s32.totalorder %s34, 1
      %p256 = por %p254, %p255
      %p258 = scmp.ne.s32.totalorder %s243, %s257
      %p259 = scmp.eq.s32.totalorder %s34, 0
      %p260 = por %p258, %p259
      %s262 = sadd.s32 %s261, 1
      %p265 = scmp.eq.s32.totalorder %s28, 1
      %p266 = scmp.ne.s32.totalorder %s261, %s263
      %p267 = scmp.eq.s32.totalorder %s28, 0
      %p268 = por %p266, %p267
      %p269 = scmp.ne.s32.totalorder %s261, %s263
      %p270 = scmp.eq.s32.totalorder %s33, 1
      %p271 = por %p269, %p270
      %p272 = scmp.ne.s32.totalorder %s263, %s264
      %p273 = scmp.eq.s32.totalorder %s33, 0
      %p274 = por %p272, %p273
      %p275 = scmp.ne.s32.totalorder %s263, %s264
      %p276 = scmp.eq.s32.totalorder %s34, 1
      %p277 = por %p275, %p276
      %p279 = scmp.ne.s32.totalorder %s264, %s278
      %p280 = scmp.eq.s32.totalorder %s34, 0
      %p281 = por %p279, %p280
      %s282 = ssub.s32 %s28, %s35
      %p283 = scmp.eq.s32.totalorder %s282, 0
      %s285 = sadd.s32 %s284, 1
      %s286 = scalar_select %p283, %s284, %s285
      %p289 = pneg %p283
      %p290 = scmp.eq.s32.totalorder %s28, 1
      %p291 = por %p289, %p290
      %p292 = scmp.ne.s32.totalorder %s284, %s287
      %p293 = scmp.eq.s32.totalorder %s28, 0
      %p294 = por %p292, %p293
      %p295 = scmp.ne.s32.totalorder %s284, %s287
      %p296 = scmp.eq.s32.totalorder %s33, 1
      %p297 = por %p295, %p296
      %p298 = scmp.ne.s32.totalorder %s287, %s288
      %p299 = scmp.eq.s32.totalorder %s33, 0
      %p300 = por %p298, %p299
      %p301 = scmp.ne.s32.totalorder %s287, %s288
      %p302 = scmp.eq.s32.totalorder %s34, 1
      %p303 = por %p301, %p302
      %p305 = scmp.ne.s32.totalorder %s288, %s304
      %p306 = scmp.eq.s32.totalorder %s34, 0
      %p307 = por %p305, %p306
      %p308 = scmp.le.s32.totalorder 1, %s28
      %p309 = scmp.lt.s32.totalorder %s28, 3
      %p310 = pnand %p308, %p309
      %p311 = pneg %p310
      // Predicated region
      $region9: #{tpu_custom_call.1} parent=5 // pred_check
        _
      $region10: #{tpu_custom_call.1} parent=5 // pred_check_branch
        %313 = sbr.rel (%p310) target = $region12
      $region11: #{tpu_custom_call.1} parent=5 // pred_region
        %s314 = ssub.s32 %s28, 1
        // Predicated region
        $region13: #{tpu_custom_call.1} parent=11 // pred_check
          %p315 = pneg %p127
        $region14: #{tpu_custom_call.1} parent=11 // pred_check_branch
          %317 = sbr.rel (%p315) target = $region16
        $region15: #{tpu_custom_call.1} parent=11 // pred_region
          %s319 = ssub.s32 256, 256
          %320 = vsyncadd [#allocation10], %s319
          %s321 = sshll.u32 [#allocation9], 4
          %s322 = int_to_ptr.vmem [resolvable:$true] %s321
          %327 = dma.hbm_to_vmem [thread:$0]  %s3, 256, %s322, [#allocation10], 64, 64, 4
        $region16: #{tpu_custom_call.1} parent=11 // pred_fallthru
          _
        // Predicated region
        $region17: #{tpu_custom_call.1} parent=11 // pred_check
          %p328 = pneg %p148
        $region18: #{tpu_custom_call.1} parent=11 // pred_check_branch
          %330 = sbr.rel (%p328) target = $region20
        $region19: #{tpu_custom_call.1} parent=11 // pred_region
          _
        $region20: #{tpu_custom_call.1} parent=11 // pred_fallthru
          _
        // Predicated region
        $region21: #{tpu_custom_call.1} parent=11 // pred_check
          %p331 = pneg %p169
        $region22: #{tpu_custom_call.1} parent=11 // pred_check_branch
          %333 = sbr.rel (%p331) target = $region24
        $region23: #{tpu_custom_call.1} parent=11 // pred_region
          _
        $region24: #{tpu_custom_call.1} parent=11 // pred_fallthru
          _
        // Predicated region
        $region25: #{tpu_custom_call.1} parent=11 // pred_check
          %p334 = pneg %p190
        $region26: #{tpu_custom_call.1} parent=11 // pred_check_branch
          %336 = sbr.rel (%p334) target = $region28
        $region27: #{tpu_custom_call.1} parent=11 // pred_region
          _
        $region28: #{tpu_custom_call.1} parent=11 // pred_fallthru
          _
        // Predicated region
        $region29: #{tpu_custom_call.1} parent=11 // pred_check
          %p337 = pneg %p211
        $region30: #{tpu_custom_call.1} parent=11 // pred_check_branch
          %339 = sbr.rel (%p337) target = $region32
        $region31: #{tpu_custom_call.1} parent=11 // pred_region
          %s341 = ssub.s32 256, 256
          %342 = vsyncadd [#allocation10], %s341
          %s343 = sshll.u32 [#allocation11], 4
          %s344 = int_to_ptr.vmem [resolvable:$true] %s343
          %349 = dma.hbm_to_vmem [thread:$0]  %s7, 256, %s344, [#allocation10], 64, 64, 4
        $region32: #{tpu_custom_call.1} parent=11 // pred_fallthru
          _
        // Predicated region
        $region33: #{tpu_custom_call.1} parent=11 // pred_check
          %p350 = pneg %p232
        $region34: #{tpu_custom_call.1} parent=11 // pred_check_branch
          %352 = sbr.rel (%p350) target = $region36
        $region35: #{tpu_custom_call.1} parent=11 // pred_region
          %s354 = ssub.s32 16, 16
          %355 = vsyncadd [#allocation13], %s354
          %s357 = sshll.u32 [#allocation12], 4
          %s358 = int_to_ptr.vmem [resolvable:$true] %s357
          %360 = dma.hbm_to_vmem [thread:$0]  %s8, 16, %s358, [#allocation13]
        $region36: #{tpu_custom_call.1} parent=11 // pred_fallthru
          _
        // Predicated region
        $region37: #{tpu_custom_call.1} parent=11 // pred_check
          %p361 = pneg %p253
        $region38: #{tpu_custom_call.1} parent=11 // pred_check_branch
          %363 = sbr.rel (%p361) target = $region40
        $region39: #{tpu_custom_call.1} parent=11 // pred_region
          _
        $region40: #{tpu_custom_call.1} parent=11 // pred_fallthru
          _
        // Predicated region
        $region41: #{tpu_custom_call.1} parent=11 // pred_check
          %p364 = pneg %p274
        $region42: #{tpu_custom_call.1} parent=11 // pred_check_branch
          %366 = sbr.rel (%p364) target = $region44
        $region43: #{tpu_custom_call.1} parent=11 // pred_region
          _
        $region44: #{tpu_custom_call.1} parent=11 // pred_fallthru
          _
      $region12: #{tpu_custom_call.1} parent=5 // pred_fallthru
        _
      %p367 = scmp.lt.s32.totalorder %s28, 2
      // Predicated region
      $region45: #{tpu_custom_call.1} parent=5 // pred_check
        %p368 = pneg %p367
      $region46: #{tpu_custom_call.1} parent=5 // pred_check_branch
        %370 = sbr.rel (%p368) target = $region48
      $region47: #{tpu_custom_call.1} parent=5 // pred_region
        // Predicated region
        $region49: #{tpu_custom_call.1} parent=47 // pred_check
          %p371 = pneg %p48
        $region50: #{tpu_custom_call.1} parent=47 // pred_check_branch
          %373 = sbr.rel (%p371) target = $region52
        $region51: #{tpu_custom_call.1} parent=47 // pred_region
          %s374 = sand.u32 %s38, 1
          %s375 = scalar_lea.sflag [#allocation4], %s374
          %s376 = sand.u32 %s38, 1
          %s377 = smul.addr %s376, 4
          %s378 = scalar_lea.vmem [#allocation3], %s377
          %s380 = ssub.s32 64, 64
          %381 = vsyncadd %s375, %s380
          %s382 = smul.addr %s28, 64
          %s383 = scalar_lea.hbm %s0, %s382
          %s385 = sshll.u32 %s378, 4
          %s386 = int_to_ptr.vmem [resolvable:$true] %s385
          %388 = dma.hbm_to_vmem [thread:$0]  %s383, 64, %s386, %s375
        $region52: #{tpu_custom_call.1} parent=47 // pred_fallthru
          _
        // Predicated region
        $region53: #{tpu_custom_call.1} parent=47 // pred_check
          %p389 = pneg %p74
        $region54: #{tpu_custom_call.1} parent=47 // pred_check_branch
          %391 = sbr.rel (%p389) target = $region56
        $region55: #{tpu_custom_call.1} parent=47 // pred_region
          %s392 = sand.u32 %s28, 1
          %s393 = scalar_lea.sflag [#allocation7], %s392
          %s394 = sand.u32 %s64, 1
          %s395 = smul.addr %s394, 4
          %s396 = scalar_lea.vmem [#allocation6], %s395
          %s398 = ssub.s32 64, 64
          %399 = vsyncadd %s393, %s398
          %s400 = smul.addr %s28, 64
          %s401 = scalar_lea.hbm %s1, %s400
          %s403 = sshll.u32 %s396, 4
          %s404 = int_to_ptr.vmem [resolvable:$true] %s403
          %406 = dma.hbm_to_vmem [thread:$0]  %s401, 64, %s404, %s393
        $region56: #{tpu_custom_call.1} parent=47 // pred_fallthru
          _
        // Predicated region
        $region57: #{tpu_custom_call.1} parent=47 // pred_check
          %p407 = pneg %p100
        $region58: #{tpu_custom_call.1} parent=47 // pred_check_branch
          %409 = sbr.rel (%p407) target = $region60
        $region59: #{tpu_custom_call.1} parent=47 // pred_region
          %s410 = sand.u32 %s28, 1
          %s411 = scalar_lea.sflag [#allocation7], %s410
          %s412 = sand.u32 %s90, 1
          %s413 = smul.addr %s412, 4
          %s414 = scalar_lea.vmem [#allocation8], %s413
          %s416 = ssub.s32 64, 64
          %417 = vsyncadd %s411, %s416
          %s418 = smul.addr %s28, 64
          %s419 = scalar_lea.hbm %s2, %s418
          %s421 = sshll.u32 %s414, 4
          %s422 = int_to_ptr.vmem [resolvable:$true] %s421
          %424 = dma.hbm_to_vmem [thread:$0]  %s419, 64, %s422, %s411
        $region60: #{tpu_custom_call.1} parent=47 // pred_fallthru
          _
      $region48: #{tpu_custom_call.1} parent=5 // pred_fallthru
        _
      %p425 = scmp.le.s32.totalorder 1, %s28
      %p426 = scmp.lt.s32.totalorder %s28, 3
      %p427 = pnand %p425, %p426
      %p428 = pneg %p427
      // Predicated region
      $region61: #{tpu_custom_call.1} parent=5 // pred_check
        _
      $region62: #{tpu_custom_call.1} parent=5 // pred_check_branch
        %430 = sbr.rel (%p427) target = $region64
      $region63: #{tpu_custom_call.1} parent=5 // pred_region
        %s431 = ssub.s32 %s28, 1
        %s432 = sand.u32 %s41, 1
        %s433 = scalar_lea.sflag [#allocation4], %s432
        %s434 = sand.u32 %s41, 1
        %s435 = smul.addr %s434, 4
        %s436 = scalar_lea.vmem [#allocation3], %s435
        // Predicated region
        $region65: #{tpu_custom_call.1} parent=63 // pred_check
          %p437 = pneg %p54
        $region66: #{tpu_custom_call.1} parent=63 // pred_check_branch
          %439 = sbr.rel (%p437) target = $region68
        $region67: #{tpu_custom_call.1} parent=63 // pred_region
          %440 = dma.done %s433, 64
        $region68: #{tpu_custom_call.1} parent=63 // pred_fallthru
          _
        %s441 = sand.u32 %s33, 1
        %s442 = scalar_lea.sflag [#allocation7], %s441
        %s443 = sand.u32 %s67, 1
        %s444 = smul.addr %s443, 4
        %s445 = scalar_lea.vmem [#allocation6], %s444
        // Predicated region
        $region69: #{tpu_custom_call.1} parent=63 // pred_check
          %p446 = pneg %p80
        $region70: #{tpu_custom_call.1} parent=63 // pred_check_branch
          %448 = sbr.rel (%p446) target = $region72
        $region71: #{tpu_custom_call.1} parent=63 // pred_region
          %449 = dma.done %s442, 64
        $region72: #{tpu_custom_call.1} parent=63 // pred_fallthru
          _
        %s450 = sand.u32 %s33, 1
        %s451 = scalar_lea.sflag [#allocation7], %s450
        %s452 = sand.u32 %s93, 1
        %s453 = smul.addr %s452, 4
        %s454 = scalar_lea.vmem [#allocation8], %s453
        // Predicated region
        $region73: #{tpu_custom_call.1} parent=63 // pred_check
          %p455 = pneg %p106
        $region74: #{tpu_custom_call.1} parent=63 // pred_check_branch
          %457 = sbr.rel (%p455) target = $region76
        $region75: #{tpu_custom_call.1} parent=63 // pred_region
          %458 = dma.done %s451, 64
        $region76: #{tpu_custom_call.1} parent=63 // pred_fallthru
          _
        // Predicated region
        $region77: #{tpu_custom_call.1} parent=63 // pred_check
          %p459 = pneg %p127
        $region78: #{tpu_custom_call.1} parent=63 // pred_check_branch
          %461 = sbr.rel (%p459) target = $region80
        $region79: #{tpu_custom_call.1} parent=63 // pred_region
          %462 = dma.done [#allocation10], 256
        $region80: #{tpu_custom_call.1} parent=63 // pred_fallthru
          _
        // Predicated region
        $region81: #{tpu_custom_call.1} parent=63 // pred_check
          %p463 = pneg %p211
        $region82: #{tpu_custom_call.1} parent=63 // pred_check_branch
          %465 = sbr.rel (%p463) target = $region84
        $region83: #{tpu_custom_call.1} parent=63 // pred_region
          %466 = dma.done [#allocation10], 256
        $region84: #{tpu_custom_call.1} parent=63 // pred_fallthru
          _
        // Predicated region
        $region85: #{tpu_custom_call.1} parent=63 // pred_check
          %p467 = pneg %p232
        $region86: #{tpu_custom_call.1} parent=63 // pred_check_branch
          %469 = sbr.rel (%p467) target = $region88
        $region87: #{tpu_custom_call.1} parent=63 // pred_region
          %470 = dma.done [#allocation13], 16
        $region88: #{tpu_custom_call.1} parent=63 // pred_fallthru
          _
        %s471 = sand.u32 %s41, 1
        %s472 = scalar_lea.sflag [#allocation4], %s471
        %s473 = sand.u32 %s41, 1
        %s474 = smul.addr %s473, 4
        %s475 = scalar_lea.vmem [#allocation3], %s474
        %p476 = pneg %p54
        %p477 = pneg %p51
        %s478 = sand.u32 %s33, 1
        %s479 = scalar_lea.sflag [#allocation7], %s478
        %s480 = sand.u32 %s67, 1
        %s481 = smul.addr %s480, 4
        %s482 = scalar_lea.vmem [#allocation6], %s481
        %p483 = pneg %p80
        %p484 = pneg %p77
        %s485 = sand.u32 %s33, 1
        %s486 = scalar_lea.sflag [#allocation7], %s485
        %s487 = sand.u32 %s93, 1
        %s488 = smul.addr %s487, 4
        %s489 = scalar_lea.vmem [#allocation8], %s488
        %p490 = pneg %p106
        %p491 = pneg %p103
        %p492 = pneg %p127
        %p493 = pneg %p124
        %p494 = pneg %p148
        %p495 = pneg %p145
        %p496 = pneg %p169
        %p497 = pneg %p166
        %p498 = pneg %p190
        %p499 = pneg %p187
        %p500 = pneg %p211
        %p501 = pneg %p208
        %p502 = pneg %p232
        %p503 = pneg %p229
        %p504 = pneg %p253
        %p505 = pneg %p250
        %p506 = pneg %p274
        %p507 = pneg %p271
        %p508 = pneg %p300
        %p509 = pneg %p297
        %s510 = sand.u32 %s287, 1
        %s511 = scalar_lea.sflag [#allocation5], %s510
        %s512 = sand.u32 %s287, 1
        %s513 = smul.addr %s512, 8
        %s514 = scalar_lea.vmem [#allocation14], %s513
        %v516 = vld [vmem:[%s436] sm:$0xf]
        %v517 = vld [vmem:[%s445] sm:$0xf]
        %v518 = vld [vmem:[%s454] sm:$0xf]
        %v519 = vld [vmem:[#allocation9] sm:$0xf]
        %v520 = vld [vmem:[#allocation9 + $0x4] sm:$0xf]
        %v521 = vld [vmem:[#allocation9 + $0x8] sm:$0xf]
        %v522 = vld [vmem:[#allocation9 + $0xc] sm:$0xf]
        %v523 = vld [vmem:[%s4] sm:$0x1]
        %v525 = vlaneseq
        %v526 = vshrl.u32 %v525, 7
        %v527 = vsub.s32 0, %v526
        %v528 = vrot.slane %v523, %v527
        %v534 = vunpack.c.l.b16 %v519
        %v535 = vunpack.c.l.b16 %v520
        %v536 = vunpack.c.l.b16 %v521
        %v537 = vunpack.c.l.b16 %v522
        %v538 = vpack.c.b16 %v535, %v534
        %v539 = vpack.c.b16 %v537, %v536
        %vm542 = vcmask 261120
        %v544 = vsel %vm542, %v516, 0
        %546 = vmatprep.subr.bf16.mxu0 0
        %547 = vmatpush1.bf16.msra.mxu0 %v538
        %548 = vmatprep.subr.bf16.mxu0 0
        %549 = vmatpush1.bf16.msra.mxu0 %v539
        %550 = vmatprep.subr.bf16.mxu0 0
        %551 = vmatpush1.bf16.msra.mxu0 0
        %552 = vmatprep.subr.bf16.mxu0 0
        %553 = vmatpush1.bf16.msra.mxu0 0
        %554 = vmatprep.subr.bf16.mxu0 0
        %555 = vmatpush1.bf16.msra.mxu0 0
        %556 = vmatprep.subr.bf16.mxu0 0
        %557 = vmatpush1.bf16.msra.mxu0 0
        %558 = vmatprep.subr.bf16.mxu0 0
        %559 = vmatpush1.bf16.msra.mxu0 0
        %560 = vmatprep.subr.bf16.mxu0 0
        %561 = vmatpush1.bf16.msra.mxu0 0
        %562 = vmatprep.subr.bf16.mxu0 0
        %563 = vmatpush1.bf16.msra.mxu0 0
        %564 = vmatprep.subr.bf16.mxu0 0
        %565 = vmatpush1.bf16.msra.mxu0 0
        %566 = vmatprep.subr.bf16.mxu0 0
        %567 = vmatpush1.bf16.msra.mxu0 0
        %568 = vmatprep.subr.bf16.mxu0 0
        %569 = vmatpush1.bf16.msra.mxu0 0
        %570 = vmatprep.subr.bf16.mxu0 0
        %571 = vmatpush1.bf16.msra.mxu0 0
        %572 = vmatprep.subr.bf16.mxu0 0
        %573 = vmatpush1.bf16.msra.mxu0 0
        %574 = vmatprep.subr.bf16.mxu0 0
        %575 = vmatpush1.bf16.msra.mxu0 0
        %576 = vmatprep.subr.bf16.mxu0 0
        %577 = vmatpush1.bf16.msra.mxu0 0
        %578 = vmatprep.mubr.bf16.mxu0 0
        %579 = vmatmul.mubr.bf16.gmra.mrb[0].mxu0 %v544
        %v580 = vpop.f32.mrb[0].mxu0
        %v581 = vadd.f32 %v528, %v580
        %v582 = vpop.f32.mrb[0].mxu0
        %v583 = vpop.f32.mrb[0].mxu0
        %v584 = vpop.f32.mrb[0].mxu0
        %585 = vdwg.mxu0
        %v586 = vld [vmem:[%s5] sm:$0xf]
        %v587 = vld [vmem:[%s5 + $0x4] sm:$0xf]
        %v588 = vld [vmem:[%s5 + $0x8] sm:$0xf]
        %v589 = vld [vmem:[%s5 + $0xc] sm:$0xf]
        %v590 = vld [vmem:[%s6] sm:$0x1]
        %v592 = vlaneseq
        %v593 = vshrl.u32 %v592, 7
        %v594 = vsub.s32 0, %v593
        %v595 = vrot.slane %v590, %v594
        %v601 = vunpack.c.l.b16 %v586
        %v602 = vunpack.c.l.b16 %v587
        %v603 = vunpack.c.l.b16 %v588
        %v604 = vunpack.c.l.b16 %v589
        %v605 = vpack.c.b16 %v602, %v601
        %v606 = vpack.c.b16 %v604, %v603
        %v610 = vsel %vm542, %v517, 0
        %612 = vmatprep.subr.bf16.mxu0 0
        %613 = vmatpush1.bf16.msra.mxu0 %v605
        %614 = vmatprep.subr.bf16.mxu0 0
        %615 = vmatpush1.bf16.msra.mxu0 %v606
        %616 = vmatprep.subr.bf16.mxu0 0
        %617 = vmatpush1.bf16.msra.mxu0 0
        %618 = vmatprep.subr.bf16.mxu0 0
        %619 = vmatpush1.bf16.msra.mxu0 0
        %620 = vmatprep.subr.bf16.mxu0 0
        %621 = vmatpush1.bf16.msra.mxu0 0
        %622 = vmatprep.subr.bf16.mxu0 0
        %623 = vmatpush1.bf16.msra.mxu0 0
        %624 = vmatprep.subr.bf16.mxu0 0
        %625 = vmatpush1.bf16.msra.mxu0 0
        %626 = vmatprep.subr.bf16.mxu0 0
        %627 = vmatpush1.bf16.msra.mxu0 0
        %628 = vmatprep.subr.bf16.mxu0 0
        %629 = vmatpush1.bf16.msra.mxu0 0
        %630 = vmatprep.subr.bf16.mxu0 0
        %631 = vmatpush1.bf16.msra.mxu0 0
        %632 = vmatprep.subr.bf16.mxu0 0
        %633 = vmatpush1.bf16.msra.mxu0 0
        %634 = vmatprep.subr.bf16.mxu0 0
        %635 = vmatpush1.bf16.msra.mxu0 0
        %636 = vmatprep.subr.bf16.mxu0 0
        %637 = vmatpush1.bf16.msra.mxu0 0
        %638 = vmatprep.subr.bf16.mxu0 0
        %639 = vmatpush1.bf16.msra.mxu0 0
        %640 = vmatprep.subr.bf16.mxu0 0
        %641 = vmatpush1.bf16.msra.mxu0 0
        %642 = vmatprep.subr.bf16.mxu0 0
        %643 = vmatpush1.bf16.msra.mxu0 0
        %644 = vmatprep.mubr.bf16.mxu0 0
        %645 = vmatmul.mubr.bf16.gmra.mrb[0].mxu0 %v610
        %v646 = vpop.f32.mrb[0].mxu0
        %v647 = vadd.f32 %v595, %v646
        %v648 = vpop.f32.mrb[0].mxu0
        %v649 = vpop.f32.mrb[0].mxu0
        %v650 = vpop.f32.mrb[0].mxu0
        %651 = vdwg.mxu0
        %v652 = vld [vmem:[#allocation11] sm:$0xf]
        %v653 = vld [vmem:[#allocation11 + $0x4] sm:$0xf]
        %v654 = vld [vmem:[#allocation11 + $0x8] sm:$0xf]
        %v655 = vld [vmem:[#allocation11 + $0xc] sm:$0xf]
        %v656 = vld [vmem:[#allocation12] sm:$0x1]
        %v658 = vlaneseq
        %v659 = vshrl.u32 %v658, 7
        %v660 = vsub.s32 0, %v659
        %v661 = vrot.slane %v656, %v660
        %v667 = vunpack.c.l.b16 %v652
        %v668 = vunpack.c.l.b16 %v653
        %v669 = vunpack.c.l.b16 %v654
        %v670 = vunpack.c.l.b16 %v655
        %v671 = vpack.c.b16 %v668, %v667
        %v672 = vpack.c.b16 %v670, %v669
        %v676 = vsel %vm542, %v518, 0
        %678 = vmatprep.subr.bf16.mxu0 0
        %679 = vmatpush1.bf16.msra.mxu0 %v671
        %680 = vmatprep.subr.bf16.mxu0 0
        %681 = vmatpush1.bf16.msra.mxu0 %v672
        %682 = vmatprep.subr.bf16.mxu0 0
        %683 = vmatpush1.bf16.msra.mxu0 0
        %684 = vmatprep.subr.bf16.mxu0 0
        %685 = vmatpush1.bf16.msra.mxu0 0
        %686 = vmatprep.subr.bf16.mxu0 0
        %687 = vmatpush1.bf16.msra.mxu0 0
        %688 = vmatprep.subr.bf16.mxu0 0
        %689 = vmatpush1.bf16.msra.mxu0 0
        %690 = vmatprep.subr.bf16.mxu0 0
        %691 = vmatpush1.bf16.msra.mxu0 0
        %692 = vmatprep.subr.bf16.mxu0 0
        %693 = vmatpush1.bf16.msra.mxu0 0
        %694 = vmatprep.subr.bf16.mxu0 0
        %695 = vmatpush1.bf16.msra.mxu0 0
        %696 = vmatprep.subr.bf16.mxu0 0
        %697 = vmatpush1.bf16.msra.mxu0 0
        %698 = vmatprep.subr.bf16.mxu0 0
        %699 = vmatpush1.bf16.msra.mxu0 0
        %700 = vmatprep.subr.bf16.mxu0 0
        %701 = vmatpush1.bf16.msra.mxu0 0
        %702 = vmatprep.subr.bf16.mxu0 0
        %703 = vmatpush1.bf16.msra.mxu0 0
        %704 = vmatprep.subr.bf16.mxu0 0
        %705 = vmatpush1.bf16.msra.mxu0 0
        %706 = vmatprep.subr.bf16.mxu0 0
        %707 = vmatpush1.bf16.msra.mxu0 0
        %708 = vmatprep.subr.bf16.mxu0 0
        %709 = vmatpush1.bf16.msra.mxu0 0
        %710 = vmatprep.mubr.bf16.mxu0 0
        %711 = vmatmul.mubr.bf16.gmra.mrb[0].mxu0 %v676
        %v712 = vpop.f32.mrb[0].mxu0
        %v713 = vadd.f32 %v661, %v712
        %v714 = vpop.f32.mrb[0].mxu0
        %v715 = vpop.f32.mrb[0].mxu0
        %v716 = vpop.f32.mrb[0].mxu0
        %717 = vdwg.mxu0
        %v718 = vpack.c.bf16 %v581, %v581
        %v719 = vpack.c.bf16 %v647, %v647
        %v720 = vpack.c.bf16 %v713, %v713
        %vm721 = vcmask 64512
        %v723 = vsel %vm721, %v718, 0
        %v726 = vsel %vm721, %v719, 0
        %728 = vmatprep.subr.bf16.mxu0 0
        %729 = vmatpush1.bf16.xpose.msra.mxu0 %v726
        %730 = vmatprep.subr.bf16.mxu0 0
        %731 = vmatpush1.bf16.xpose.msra.mxu0 0
        %732 = vmatprep.subr.bf16.mxu0 0
        %733 = vmatpush1.bf16.xpose.msra.mxu0 0
        %734 = vmatprep.subr.bf16.mxu0 0
        %735 = vmatpush1.bf16.xpose.msra.mxu0 0
        %736 = vmatprep.subr.bf16.mxu0 0
        %737 = vmatpush1.bf16.xpose.msra.mxu0 0
        %738 = vmatprep.subr.bf16.mxu0 0
        %739 = vmatpush1.bf16.xpose.msra.mxu0 0
        %740 = vmatprep.subr.bf16.mxu0 0
        %741 = vmatpush1.bf16.xpose.msra.mxu0 0
        %742 = vmatprep.subr.bf16.mxu0 0
        %743 = vmatpush1.bf16.xpose.msra.mxu0 0
        %744 = vmatprep.subr.bf16.mxu0 0
        %745 = vmatpush1.bf16.xpose.msra.mxu0 0
        %746 = vmatprep.subr.bf16.mxu0 0
        %747 = vmatpush1.bf16.xpose.msra.mxu0 0
        %748 = vmatprep.subr.bf16.mxu0 0
        %749 = vmatpush1.bf16.xpose.msra.mxu0 0
        %750 = vmatprep.subr.bf16.mxu0 0
        %751 = vmatpush1.bf16.xpose.msra.mxu0 0
        %752 = vmatprep.subr.bf16.mxu0 0
        %753 = vmatpush1.bf16.xpose.msra.mxu0 0
        %754 = vmatprep.subr.bf16.mxu0 0
        %755 = vmatpush1.bf16.xpose.msra.mxu0 0
        %756 = vmatprep.subr.bf16.mxu0 0
        %757 = vmatpush1.bf16.xpose.msra.mxu0 0
        %758 = vmatprep.subr.bf16.mxu0 0
        %759 = vmatpush1.bf16.xpose.msra.mxu0 0
        %760 = vmatprep.mubr.bf16.mxu0 0
        %761 = vmatmul.mubr.bf16.gmra.mrb[0].mxu0 %v723
        %v762 = vpop.f32.mrb[0].mxu0
        %v763 = vadd.f32 0.0, %v762
        %v764 = vpop.f32.mrb[0].mxu0
        %v765 = vpop.f32.mrb[0].mxu0
        %v766 = vpop.f32.mrb[0].mxu0
        %767 = vdwg.mxu0
        %v768 = vsel %vm721, %v763, -inf
        %769 = vmax.xlane.f32.xlu0 %v768
        %v770 = vpop.xlane.xlu0 %769
        %v771 = vsub.f32 %v763, %v770
        %v772 = vmul.f32 %v771, 1.442695
        %v773 = vpow.pop %v772
        %v774 = vsel %vm721, %v773, 0.0
        %775 = vadd.xlane.f32.xlu0 %v774
        %v776 = vpop.xlane.xlu0 %775
        %v777 = vrcp.pop %v776
        %v778 = vmul.f32 %v773, %v777
        %v779 = vpack.c.bf16 %v778, %v778
        %v781 = vsel %vm721, %v779, 0
        %vm783 = vcmask 1043456
        %v785 = vsel %vm783, %v720, 0
        %787 = vmatprep.subr.bf16.mxu0 0
        %788 = vmatpush1.bf16.msra.mxu0 %v785
        %789 = vmatprep.subr.bf16.mxu0 0
        %790 = vmatpush1.bf16.msra.mxu0 0
        %791 = vmatprep.subr.bf16.mxu0 0
        %792 = vmatpush1.bf16.msra.mxu0 0
        %793 = vmatprep.subr.bf16.mxu0 0
        %794 = vmatpush1.bf16.msra.mxu0 0
        %795 = vmatprep.subr.bf16.mxu0 0
        %796 = vmatpush1.bf16.msra.mxu0 0
        %797 = vmatprep.subr.bf16.mxu0 0
        %798 = vmatpush1.bf16.msra.mxu0 0
        %799 = vmatprep.subr.bf16.mxu0 0
        %800 = vmatpush1.bf16.msra.mxu0 0
        %801 = vmatprep.subr.bf16.mxu0 0
        %802 = vmatpush1.bf16.msra.mxu0 0
        %803 = vmatprep.subr.bf16.mxu0 0
        %804 = vmatpush1.bf16.msra.mxu0 0
        %805 = vmatprep.subr.bf16.mxu0 0
        %806 = vmatpush1.bf16.msra.mxu0 0
        %807 = vmatprep.subr.bf16.mxu0 0
        %808 = vmatpush1.bf16.msra.mxu0 0
        %809 = vmatprep.subr.bf16.mxu0 0
        %810 = vmatpush1.bf16.msra.mxu0 0
        %811 = vmatprep.subr.bf16.mxu0 0
        %812 = vmatpush1.bf16.msra.mxu0 0
        %813 = vmatprep.subr.bf16.mxu0 0
        %814 = vmatpush1.bf16.msra.mxu0 0
        %815 = vmatprep.subr.bf16.mxu0 0
        %816 = vmatpush1.bf16.msra.mxu0 0
        %817 = vmatprep.subr.bf16.mxu0 0
        %818 = vmatpush1.bf16.msra.mxu0 0
        %819 = vmatprep.mubr.bf16.mxu0 0
        %820 = vmatmul.mubr.bf16.gmra.mrb[0].mxu0 %v781
        %v821 = vpop.f32.mrb[0].mxu0
        %v822 = vadd.f32 0.0, %v821
        %v823 = vpop.f32.mrb[0].mxu0
        %v824 = vpop.f32.mrb[0].mxu0
        %v825 = vpop.f32.mrb[0].mxu0
        %826 = vdwg.mxu0
        %v827 = vpack.c.bf16 %v822, %v822
        %vm828 = vcmask 60416
        %829 = vst.msk [vmem:[#allocation2] sm:$0xf] %vm828, %v827
        %831 = vrot.lane.b32.xlu0 %v718, 120
        %v832 = vpop.permute.xlu0 %831
        %834 = vrot.lane.b32.xlu0 %v719, 120
        %v835 = vpop.permute.xlu0 %834
        %v837 = vsel %vm721, %v832, 0
        %v840 = vsel %vm721, %v835, 0
        %842 = vmatprep.subr.bf16.mxu0 0
        %843 = vmatpush1.bf16.xpose.msra.mxu0 %v840
        %844 = vmatprep.subr.bf16.mxu0 0
        %845 = vmatpush1.bf16.xpose.msra.mxu0 0
        %846 = vmatprep.subr.bf16.mxu0 0
        %847 = vmatpush1.bf16.xpose.msra.mxu0 0
        %848 = vmatprep.subr.bf16.mxu0 0
        %849 = vmatpush1.bf16.xpose.msra.mxu0 0
        %850 = vmatprep.subr.bf16.mxu0 0
        %851 = vmatpush1.bf16.xpose.msra.mxu0 0
        %852 = vmatprep.subr.bf16.mxu0 0
        %853 = vmatpush1.bf16.xpose.msra.mxu0 0
        %854 = vmatprep.subr.bf16.mxu0 0
        %855 = vmatpush1.bf16.xpose.msra.mxu0 0
        %856 = vmatprep.subr.bf16.mxu0 0
        %857 = vmatpush1.bf16.xpose.msra.mxu0 0
        %858 = vmatprep.subr.bf16.mxu0 0
        %859 = vmatpush1.bf16.xpose.msra.mxu0 0
        %860 = vmatprep.subr.bf16.mxu0 0
        %861 = vmatpush1.bf16.xpose.msra.mxu0 0
        %862 = vmatprep.subr.bf16.mxu0 0
        %863 = vmatpush1.bf16.xpose.msra.mxu0 0
        %864 = vmatprep.subr.bf16.mxu0 0
        %865 = vmatpush1.bf16.xpose.msra.mxu0 0
        %866 = vmatprep.subr.bf16.mxu0 0
        %867 = vmatpush1.bf16.xpose.msra.mxu0 0
        %868 = vmatprep.subr.bf16.mxu0 0
        %869 = vmatpush1.bf16.xpose.msra.mxu0 0
        %870 = vmatprep.subr.bf16.mxu0 0
        %871 = vmatpush1.bf16.xpose.msra.mxu0 0
        %872 = vmatprep.subr.bf16.mxu0 0
        %873 = vmatpush1.bf16.xpose.msra.mxu0 0
        %874 = vmatprep.mubr.bf16.mxu0 0
        %875 = vmatmul.mubr.bf16.gmra.mrb[0].mxu0 %v837
        %v876 = vpop.f32.mrb[0].mxu0
        %v877 = vadd.f32 0.0, %v876
        %v878 = vpop.f32.mrb[0].mxu0
        %v879 = vpop.f32.mrb[0].mxu0
        %v880 = vpop.f32.mrb[0].mxu0
        %881 = vdwg.mxu0
        %v882 = vsel %vm721, %v877, -inf
        %883 = vmax.xlane.f32.xlu0 %v882
        %v884 = vpop.xlane.xlu0 %883
        %v885 = vsub.f32 %v877, %v884
        %v886 = vmul.f32 %v885, 1.442695
        %v887 = vpow.pop %v886
        %v888 = vsel %vm721, %v887, 0.0
        %889 = vadd.xlane.f32.xlu0 %v888
        %v890 = vpop.xlane.xlu0 %889
        %v891 = vrcp.pop %v890
        %v892 = vmul.f32 %v887, %v891
        %v893 = vpack.c.bf16 %v892, %v892
        %895 = vrot.lane.b32.xlu0 %v720, 120
        %v896 = vpop.permute.xlu0 %895
        %v898 = vsel %vm721, %v893, 0
        %v901 = vsel %vm783, %v896, 0
        %903 = vmatprep.subr.bf16.mxu0 0
        %904 = vmatpush1.bf16.msra.mxu0 %v901
        %905 = vmatprep.subr.bf16.mxu0 0
        %906 = vmatpush1.bf16.msra.mxu0 0
        %907 = vmatprep.subr.bf16.mxu0 0
        %908 = vmatpush1.bf16.msra.mxu0 0
        %909 = vmatprep.subr.bf16.mxu0 0
        %910 = vmatpush1.bf16.msra.mxu0 0
        %911 = vmatprep.subr.bf16.mxu0 0
        %912 = vmatpush1.bf16.msra.mxu0 0
        %913 = vmatprep.subr.bf16.mxu0 0
        %914 = vmatpush1.bf16.msra.mxu0 0
        %915 = vmatprep.subr.bf16.mxu0 0
        %916 = vmatpush1.bf16.msra.mxu0 0
        %917 = vmatprep.subr.bf16.mxu0 0
        %918 = vmatpush1.bf16.msra.mxu0 0
        %919 = vmatprep.subr.bf16.mxu0 0
        %920 = vmatpush1.bf16.msra.mxu0 0
        %921 = vmatprep.subr.bf16.mxu0 0
        %922 = vmatpush1.bf16.msra.mxu0 0
        %923 = vmatprep.subr.bf16.mxu0 0
        %924 = vmatpush1.bf16.msra.mxu0 0
        %925 = vmatprep.subr.bf16.mxu0 0
        %926 = vmatpush1.bf16.msra.mxu0 0
        %927 = vmatprep.subr.bf16.mxu0 0
        %928 = vmatpush1.bf16.msra.mxu0 0
        %929 = vmatprep.subr.bf16.mxu0 0
        %930 = vmatpush1.bf16.msra.mxu0 0
        %931 = vmatprep.subr.bf16.mxu0 0
        %932 = vmatpush1.bf16.msra.mxu0 0
        %933 = vmatprep.subr.bf16.mxu0 0
        %934 = vmatpush1.bf16.msra.mxu0 0
        %935 = vmatprep.mubr.bf16.mxu0 0
        %936 = vmatmul.mubr.bf16.gmra.mrb[0].mxu0 %v898
        %v937 = vpop.f32.mrb[0].mxu0
        %v938 = vadd.f32 0.0, %v937
        %v939 = vpop.f32.mrb[0].mxu0
        %v940 = vpop.f32.mrb[0].mxu0
        %v941 = vpop.f32.mrb[0].mxu0
        %942 = vdwg.mxu0
        %v943 = vpack.c.bf16 %v938, %v938
        %v945 = vunpack.c.l.b16 %v943
        %v946 = vpack.c.b16 %v945, %v945
        %947 = vrot.lane.b32.xlu0 %v946, 8
        %v948 = vpop.permute.xlu0 %947
        %vm950 = vcmask 126016
        %951 = vst.msk [vmem:[#allocation2] sm:$0xf] %vm950, %v948
        %952 = vrot.lane.b32.xlu0 %v718, 112
        %v953 = vpop.permute.xlu0 %952
        %954 = vrot.lane.b32.xlu0 %v719, 112
        %v955 = vpop.permute.xlu0 %954
        %v957 = vsel %vm721, %v953, 0
        %v960 = vsel %vm721, %v955, 0
        %962 = vmatprep.subr.bf16.mxu0 0
        %963 = vmatpush1.bf16.xpose.msra.mxu0 %v960
        %964 = vmatprep.subr.bf16.mxu0 0
        %965 = vmatpush1.bf16.xpose.msra.mxu0 0
        %966 = vmatprep.subr.bf16.mxu0 0
        %967 = vmatpush1.bf16.xpose.msra.mxu0 0
        %968 = vmatprep.subr.bf16.mxu0 0
        %969 = vmatpush1.bf16.xpose.msra.mxu0 0
        %970 = vmatprep.subr.bf16.mxu0 0
        %971 = vmatpush1.bf16.xpose.msra.mxu0 0
        %972 = vmatprep.subr.bf16.mxu0 0
        %973 = vmatpush1.bf16.xpose.msra.mxu0 0
        %974 = vmatprep.subr.bf16.mxu0 0
        %975 = vmatpush1.bf16.xpose.msra.mxu0 0
        %976 = vmatprep.subr.bf16.mxu0 0
        %977 = vmatpush1.bf16.xpose.msra.mxu0 0
        %978 = vmatprep.subr.bf16.mxu0 0
        %979 = vmatpush1.bf16.xpose.msra.mxu0 0
        %980 = vmatprep.subr.bf16.mxu0 0
        %981 = vmatpush1.bf16.xpose.msra.mxu0 0
        %982 = vmatprep.subr.bf16.mxu0 0
        %983 = vmatpush1.bf16.xpose.msra.mxu0 0
        %984 = vmatprep.subr.bf16.mxu0 0
        %985 = vmatpush1.bf16.xpose.msra.mxu0 0
        %986 = vmatprep.subr.bf16.mxu0 0
        %987 = vmatpush1.bf16.xpose.msra.mxu0 0
        %988 = vmatprep.subr.bf16.mxu0 0
        %989 = vmatpush1.bf16.xpose.msra.mxu0 0
        %990 = vmatprep.subr.bf16.mxu0 0
        %991 = vmatpush1.bf16.xpose.msra.mxu0 0
        %992 = vmatprep.subr.bf16.mxu0 0
        %993 = vmatpush1.bf16.xpose.msra.mxu0 0
        %994 = vmatprep.mubr.bf16.mxu0 0
        %995 = vmatmul.mubr.bf16.gmra.mrb[0].mxu0 %v957
        %v996 = vpop.f32.mrb[0].mxu0
        %v997 = vadd.f32 0.0, %v996
        %v998 = vpop.f32.mrb[0].mxu0
        %v999 = vpop.f32.mrb[0].mxu0
        %v1000 = vpop.f32.mrb[0].mxu0
        %1001 = vdwg.mxu0
        %v1002 = vsel %vm721, %v997, -inf
        %1003 = vmax.xlane.f32.xlu0 %v1002
        %v1004 = vpop.xlane.xlu0 %1003
        %v1005 = vsub.f32 %v997, %v1004
        %v1006 = vmul.f32 %v1005, 1.442695
        %v1007 = vpow.pop %v1006
        %v1008 = vsel %vm721, %v1007, 0.0
        %1009 = vadd.xlane.f32.xlu0 %v1008
        %v1010 = vpop.xlane.xlu0 %1009
        %v1011 = vrcp.pop %v1010
        %v1012 = vmul.f32 %v1007, %v1011
        %v1013 = vpack.c.bf16 %v1012, %v1012
        %1014 = vrot.lane.b32.xlu0 %v720, 112
        %v1015 = vpop.permute.xlu0 %1014
        %v1017 = vsel %vm721, %v1013, 0
        %v1020 = vsel %vm783, %v1015, 0
        %1022 = vmatprep.subr.bf16.mxu0 0
        %1023 = vmatpush1.bf16.msra.mxu0 %v1020
        %1024 = vmatprep.subr.bf16.mxu0 0
        %1025 = vmatpush1.bf16.msra.mxu0 0
        %1026 = vmatprep.subr.bf16.mxu0 0
        %1027 = vmatpush1.bf16.msra.mxu0 0
        %1028 = vmatprep.subr.bf16.mxu0 0
        %1029 = vmatpush1.bf16.msra.mxu0 0
        %1030 = vmatprep.subr.bf16.mxu0 0
        %1031 = vmatpush1.bf16.msra.mxu0 0
        %1032 = vmatprep.subr.bf16.mxu0 0
        %1033 = vmatpush1.bf16.msra.mxu0 0
        %1034 = vmatprep.subr.bf16.mxu0 0
        %1035 = vmatpush1.bf16.msra.mxu0 0
        %1036 = vmatprep.subr.bf16.mxu0 0
        %1037 = vmatpush1.bf16.msra.mxu0 0
        %1038 = vmatprep.subr.bf16.mxu0 0
        %1039 = vmatpush1.bf16.msra.mxu0 0
        %1040 = vmatprep.subr.bf16.mxu0 0
        %1041 = vmatpush1.bf16.msra.mxu0 0
        %1042 = vmatprep.subr.bf16.mxu0 0
        %1043 = vmatpush1.bf16.msra.mxu0 0
        %1044 = vmatprep.subr.bf16.mxu0 0
        %1045 = vmatpush1.bf16.msra.mxu0 0
        %1046 = vmatprep.subr.bf16.mxu0 0
        %1047 = vmatpush1.bf16.msra.mxu0 0
        %1048 = vmatprep.subr.bf16.mxu0 0
        %1049 = vmatpush1.bf16.msra.mxu0 0
        %1050 = vmatprep.subr.bf16.mxu0 0
        %1051 = vmatpush1.bf16.msra.mxu0 0
        %1052 = vmatprep.subr.bf16.mxu0 0
        %1053 = vmatpush1.bf16.msra.mxu0 0
        %1054 = vmatprep.mubr.bf16.mxu0 0
        %1055 = vmatmul.mubr.bf16.gmra.mrb[0].mxu0 %v1017
        %v1056 = vpop.f32.mrb[0].mxu0
        %v1057 = vadd.f32 0.0, %v1056
        %v1058 = vpop.f32.mrb[0].mxu0
        %v1059 = vpop.f32.mrb[0].mxu0
        %v1060 = vpop.f32.mrb[0].mxu0
        %1061 = vdwg.mxu0
        %v1062 = vpack.c.bf16 %v1057, %v1057
        %v1064 = vunpack.c.l.b16 %v1062
        %v1065 = vpack.c.b16 %v1064, %v1064
        %1066 = vrot.lane.b32.xlu0 %v1065, 16
        %v1067 = vpop.permute.xlu0 %1066
        %vm1069 = vcmask 191616
        %1070 = vst.msk [vmem:[#allocation2] sm:$0xf] %vm1069, %v1067
        %1071 = vrot.lane.b32.xlu0 %v718, 104
        %v1072 = vpop.permute.xlu0 %1071
        %1073 = vrot.lane.b32.xlu0 %v719, 104
        %v1074 = vpop.permute.xlu0 %1073
        %v1076 = vsel %vm721, %v1072, 0
        %v1079 = vsel %vm721, %v1074, 0
        %1081 = vmatprep.subr.bf16.mxu0 0
        %1082 = vmatpush1.bf16.xpose.msra.mxu0 %v1079
        %1083 = vmatprep.subr.bf16.mxu0 0
        %1084 = vmatpush1.bf16.xpose.msra.mxu0 0
        %1085 = vmatprep.subr.bf16.mxu0 0
        %1086 = vmatpush1.bf16.xpose.msra.mxu0 0
        %1087 = vmatprep.subr.bf16.mxu0 0
        %1088 = vmatpush1.bf16.xpose.msra.mxu0 0
        %1089 = vmatprep.subr.bf16.mxu0 0
        %1090 = vmatpush1.bf16.xpose.msra.mxu0 0
        %1091 = vmatprep.subr.bf16.mxu0 0
        %1092 = vmatpush1.bf16.xpose.msra.mxu0 0
        %1093 = vmatprep.subr.bf16.mxu0 0
        %1094 = vmatpush1.bf16.xpose.msra.mxu0 0
        %1095 = vmatprep.subr.bf16.mxu0 0
        %1096 = vmatpush1.bf16.xpose.msra.mxu0 0
        %1097 = vmatprep.subr.bf16.mxu0 0
        %1098 = vmatpush1.bf16.xpose.msra.mxu0 0
        %1099 = vmatprep.subr.bf16.mxu0 0
        %1100 = vmatpush1.bf16.xpose.msra.mxu0 0
        %1101 = vmatprep.subr.bf16.mxu0 0
        %1102 = vmatpush1.bf16.xpose.msra.mxu0 0
        %1103 = vmatprep.subr.bf16.mxu0 0
        %1104 = vmatpush1.bf16.xpose.msra.mxu0 0
        %1105 = vmatprep.subr.bf16.mxu0 0
        %1106 = vmatpush1.bf16.xpose.msra.mxu0 0
        %1107 = vmatprep.subr.bf16.mxu0 0
        %1108 = vmatpush1.bf16.xpose.msra.mxu0 0
        %1109 = vmatprep.subr.bf16.mxu0 0
        %1110 = vmatpush1.bf16.xpose.msra.mxu0 0
        %1111 = vmatprep.subr.bf16.mxu0 0
        %1112 = vmatpush1.bf16.xpose.msra.mxu0 0
        %1113 = vmatprep.mubr.bf16.mxu0 0
        %1114 = vmatmul.mubr.bf16.gmra.mrb[0].mxu0 %v1076
        %v1115 = vpop.f32.mrb[0].mxu0
        %v1116 = vadd.f32 0.0, %v1115
        %v1117 = vpop.f32.mrb[0].mxu0
        %v1118 = vpop.f32.mrb[0].mxu0
        %v1119 = vpop.f32.mrb[0].mxu0
        %1120 = vdwg.mxu0
        %v1121 = vsel %vm721, %v1116, -inf
        %1122 = vmax.xlane.f32.xlu0 %v1121
        %v1123 = vpop.xlane.xlu0 %1122
        %v1124 = vsub.f32 %v1116, %v1123
        %v1125 = vmul.f32 %v1124, 1.442695
        %v1126 = vpow.pop %v1125
        %v1127 = vsel %vm721, %v1126, 0.0
        %1128 = vadd.xlane.f32.xlu0 %v1127
        %v1129 = vpop.xlane.xlu0 %1128
        %v1130 = vrcp.pop %v1129
        %v1131 = vmul.f32 %v1126, %v1130
        %v1132 = vpack.c.bf16 %v1131, %v1131
        %1133 = vrot.lane.b32.xlu0 %v720, 104
        %v1134 = vpop.permute.xlu0 %1133
        %v1136 = vsel %vm721, %v1132, 0
        %v1139 = vsel %vm783, %v1134, 0
        %1141 = vmatprep.subr.bf16.mxu0 0
        %1142 = vmatpush1.bf16.msra.mxu0 %v1139
        %1143 = vmatprep.subr.bf16.mxu0 0
        %1144 = vmatpush1.bf16.msra.mxu0 0
        %1145 = vmatprep.subr.bf16.mxu0 0
        %1146 = vmatpush1.bf16.msra.mxu0 0
        %1147 = vmatprep.subr.bf16.mxu0 0
        %1148 = vmatpush1.bf16.msra.mxu0 0
        %1149 = vmatprep.subr.bf16.mxu0 0
        %1150 = vmatpush1.bf16.msra.mxu0 0
        %1151 = vmatprep.subr.bf16.mxu0 0
        %1152 = vmatpush1.bf16.msra.mxu0 0
        %1153 = vmatprep.subr.bf16.mxu0 0
        %1154 = vmatpush1.bf16.msra.mxu0 0
        %1155 = vmatprep.subr.bf16.mxu0 0
        %1156 = vmatpush1.bf16.msra.mxu0 0
        %1157 = vmatprep.subr.bf16.mxu0 0
        %1158 = vmatpush1.bf16.msra.mxu0 0
        %1159 = vmatprep.subr.bf16.mxu0 0
        %1160 = vmatpush1.bf16.msra.mxu0 0
        %1161 = vmatprep.subr.bf16.mxu0 0
        %1162 = vmatpush1.bf16.msra.mxu0 0
        %1163 = vmatprep.subr.bf16.mxu0 0
        %1164 = vmatpush1.bf16.msra.mxu0 0
        %1165 = vmatprep.subr.bf16.mxu0 0
        %1166 = vmatpush1.bf16.msra.mxu0 0
        %1167 = vmatprep.subr.bf16.mxu0 0
        %1168 = vmatpush1.bf16.msra.mxu0 0
        %1169 = vmatprep.subr.bf16.mxu0 0
        %1170 = vmatpush1.bf16.msra.mxu0 0
        %1171 = vmatprep.subr.bf16.mxu0 0
        %1172 = vmatpush1.bf16.msra.mxu0 0
        %1173 = vmatprep.mubr.bf16.mxu0 0
        %1174 = vmatmul.mubr.bf16.gmra.mrb[0].mxu0 %v1136
        %v1175 = vpop.f32.mrb[0].mxu0
        %v1176 = vadd.f32 0.0, %v1175
        %v1177 = vpop.f32.mrb[0].mxu0
        %v1178 = vpop.f32.mrb[0].mxu0
        %v1179 = vpop.f32.mrb[0].mxu0
        %1180 = vdwg.mxu0
        %v1181 = vpack.c.bf16 %v1176, %v1176
        %v1183 = vunpack.c.l.b16 %v1181
        %v1184 = vpack.c.b16 %v1183, %v1183
        %1185 = vrot.lane.b32.xlu0 %v1184, 24
        %v1186 = vpop.permute.xlu0 %1185
        %vm1188 = vcmask 257216
        %1189 = vst.msk [vmem:[#allocation2] sm:$0xf] %vm1188, %v1186
        %v1190 = vld [vmem:[#allocation2] sm:$0xf]
        %v1191 = vld [vmem:[%s9] sm:$0xf]
        %v1192 = vld [vmem:[%s9 + $0x4] sm:$0xf]
        %v1193 = vld [vmem:[%s9 + $0x8] sm:$0xf]
        %v1194 = vld [vmem:[%s9 + $0xc] sm:$0xf]
        %v1195 = vld [vmem:[%s10] sm:$0x1]
        %v1197 = vlaneseq
        %v1198 = vshrl.u32 %v1197, 7
        %v1199 = vsub.s32 0, %v1198
        %v1200 = vrot.slane %v1195, %v1199
        %v1206 = vunpack.c.l.b16 %v1191
        %v1207 = vunpack.c.l.b16 %v1192
        %v1208 = vunpack.c.l.b16 %v1193
        %v1209 = vunpack.c.l.b16 %v1194
        %v1210 = vpack.c.b16 %v1207, %v1206
        %v1211 = vpack.c.b16 %v1209, %v1208
        %v1215 = vsel %vm542, %v1190, 0
        %1217 = vmatprep.subr.bf16.mxu0 0
        %1218 = vmatpush1.bf16.msra.mxu0 %v1210
        %1219 = vmatprep.subr.bf16.mxu0 0
        %1220 = vmatpush1.bf16.msra.mxu0 %v1211
        %1221 = vmatprep.subr.bf16.mxu0 0
        %1222 = vmatpush1.bf16.msra.mxu0 0
        %1223 = vmatprep.subr.bf16.mxu0 0
        %1224 = vmatpush1.bf16.msra.mxu0 0
        %1225 = vmatprep.subr.bf16.mxu0 0
        %1226 = vmatpush1.bf16.msra.mxu0 0
        %1227 = vmatprep.subr.bf16.mxu0 0
        %1228 = vmatpush1.bf16.msra.mxu0 0
        %1229 = vmatprep.subr.bf16.mxu0 0
        %1230 = vmatpush1.bf16.msra.mxu0 0
        %1231 = vmatprep.subr.bf16.mxu0 0
        %1232 = vmatpush1.bf16.msra.mxu0 0
        %1233 = vmatprep.subr.bf16.mxu0 0
        %1234 = vmatpush1.bf16.msra.mxu0 0
        %1235 = vmatprep.subr.bf16.mxu0 0
        %1236 = vmatpush1.bf16.msra.mxu0 0
        %1237 = vmatprep.subr.bf16.mxu0 0
        %1238 = vmatpush1.bf16.msra.mxu0 0
        %1239 = vmatprep.subr.bf16.mxu0 0
        %1240 = vmatpush1.bf16.msra.mxu0 0
        %1241 = vmatprep.subr.bf16.mxu0 0
        %1242 = vmatpush1.bf16.msra.mxu0 0
        %1243 = vmatprep.subr.bf16.mxu0 0
        %1244 = vmatpush1.bf16.msra.mxu0 0
        %1245 = vmatprep.subr.bf16.mxu0 0
        %1246 = vmatpush1.bf16.msra.mxu0 0
        %1247 = vmatprep.subr.bf16.mxu0 0
        %1248 = vmatpush1.bf16.msra.mxu0 0
        %1249 = vmatprep.mubr.bf16.mxu0 0
        %1250 = vmatmul.mubr.bf16.gmra.mrb[0].mxu0 %v1215
        %v1251 = vpop.f32.mrb[0].mxu0
        %v1252 = vadd.f32 %v1200, %v1251
        %v1253 = vpop.f32.mrb[0].mxu0
        %v1254 = vpop.f32.mrb[0].mxu0
        %v1255 = vpop.f32.mrb[0].mxu0
        %1256 = vdwg.mxu0
        %1257 = vst.msk [vmem:[%s514] sm:$0xff] %vm542, %v1252
        %s1258 = sand.u32 %s287, 1
        %s1259 = scalar_lea.sflag [#allocation5], %s1258
        %s1260 = sand.u32 %s287, 1
        %s1261 = smul.addr %s1260, 8
        %s1262 = scalar_lea.vmem [#allocation14], %s1261
        // Predicated region
        $region89: #{tpu_custom_call.1} parent=63 // pred_check
          %p1263 = pneg %p297
        $region90: #{tpu_custom_call.1} parent=63 // pred_check_branch
          %1265 = sbr.rel (%p1263) target = $region92
        $region91: #{tpu_custom_call.1} parent=63 // pred_region
          %s1267 = ssub.s32 128, 128
          %1268 = vsyncadd %s1259, %s1267
          %s1269 = smul.addr %s33, 128
          %s1270 = scalar_lea.hbm %s11, %s1269
          %s1272 = sshll.u32 %s1262, 4
          %s1273 = int_to_ptr.vmem [resolvable:$true] %s1272
          %1275 = dma.vmem_to_hbm [thread:$0]  %s1273, 128, %s1270, %s1259
        $region92: #{tpu_custom_call.1} parent=63 // pred_fallthru
          _
      $region64: #{tpu_custom_call.1} parent=5 // pred_fallthru
        _
      %p1276 = scmp.le.s32.totalorder 2, %s28
      // Predicated region
      $region93: #{tpu_custom_call.1} parent=5 // pred_check
        %p1277 = pneg %p1276
      $region94: #{tpu_custom_call.1} parent=5 // pred_check_branch
        %1279 = sbr.rel (%p1277) target = $region96
      $region95: #{tpu_custom_call.1} parent=5 // pred_region
        %s1280 = ssub.s32 %s28, 2
        // Predicated region
        $region97: #{tpu_custom_call.1} parent=95 // pred_check
          %p1281 = pneg %p303
        $region98: #{tpu_custom_call.1} parent=95 // pred_check_branch
          %1283 = sbr.rel (%p1281) target = $region100
        $region99: #{tpu_custom_call.1} parent=95 // pred_region
          %s1284 = sand.u32 %s288, 1
          %s1285 = scalar_lea.sflag [#allocation5], %s1284
          %s1286 = sand.u32 %s288, 1
          %s1287 = smul.addr %s1286, 8
          %s1288 = scalar_lea.vmem [#allocation14], %s1287
          %1289 = dma.done %s1285, 128
        $region100: #{tpu_custom_call.1} parent=95 // pred_fallthru
          _
      $region96: #{tpu_custom_call.1} parent=5 // pred_fallthru
        _
    $region6: #{tpu_custom_call.1} parent=1 // loop_footer
      %s32 = sadd.s32 1, %s28
    $region7: #{tpu_custom_call.1} parent=1 // loop_footer_branch
      %27 = sbr.rel target = $region3
    $region8: #{tpu_custom_call.1} parent=1 // loop_exit
      _
    %1290 = vsyncpa [#allocation4], 1
    %s1291 = scalar_lea.sflag [#allocation4], 1
    %1292 = vsyncpa %s1291, 1
    %1293 = vsyncpa [#allocation7], 1
    %s1294 = scalar_lea.sflag [#allocation7], 1
    %1295 = vsyncpa %s1294, 1
    %1296 = vsyncpa [#allocation10], 1
    %1297 = vsyncpa [#allocation13], 1
    %1298 = vsyncpa [#allocation5], 1
    %s1299 = scalar_lea.sflag [#allocation5], 1
    %1300 = vsyncpa %s1299, 1

</llo_original>
